<compile_context>
chip_gen: v6e
topology: v6e:2x2x1
jax: 0.10.0
libtpu: 0.0.40
codegen_flags: <defaults>
</compile_context>

<pallas_src>
import functools

import jax
import jax.numpy as jnp
from jax.experimental import pallas as pl
from jax.experimental.pallas import tpu as pltpu


# ---------------------------------------------------------------------------
# Fused forward kernel
# ---------------------------------------------------------------------------
def _critic_fused_kernel(
    # node features (node rows permuted so each type is contiguous)
    ev_ref, cs_ref, tr_ref, env_ref,
    # graph operators & action
    a_ref, pool_ref, act_ref,
    # per-type embedding params
    ev_w, ev_b, cs_w, cs_b, tr_w, tr_b, env_w, env_b,
    # GCN params
    g1_w, g1_b, g2_w, g2_b, g3_w, g3_b,
    # packed dual-head MLP params (heads along lanes / block-diagonal)
    m1s_w, m1a_w, m1_b, m2_w, m2_b, m3_w, m3_b,
    # output
    q_ref,
    # scratch
    emb_ref,
    *, type_counts,
):
    def dot(a, b):
        return jnp.dot(a, b, preferred_element_type=jnp.float32)

    # --- per-type linear embeddings -> contiguous row slices (no scatter) ---
    n_ev, n_cs, n_tr, n_env = type_counts
    o = 0
    emb_ref[pl.ds(o, n_ev), :] = dot(ev_ref[...], ev_w[...]) + ev_b[...]
    o += n_ev
    emb_ref[pl.ds(o, n_cs), :] = dot(cs_ref[...], cs_w[...]) + cs_b[...]
    o += n_cs
    emb_ref[pl.ds(o, n_tr), :] = dot(tr_ref[...], tr_w[...]) + tr_b[...]
    o += n_tr
    emb_ref[pl.ds(o, n_env), :] = dot(env_ref[...], env_w[...]) + env_b[...]

    # --- 3x GCNConv + ReLU; A_norm loaded into vregs once and reused ---
    a = a_ref[...]
    x = emb_ref[...]
    x = jnp.maximum(dot(a, dot(x, g1_w[...])) + g1_b[...], 0.0)
    x = jnp.maximum(dot(a, dot(x, g2_w[...])) + g2_b[...], 0.0)
    x = jnp.maximum(dot(a, dot(x, g3_w[...])) + g3_b[...], 0.0)

    # --- global mean pool -> pooled "state" embedding ---
    pooled = dot(pool_ref[...], x)                       # [B, 4*hidden]

    # --- packed dual Q-heads; sa-concat replaced by a split first layer ---
    h = dot(pooled, m1s_w[...]) + dot(act_ref[...], m1a_w[...]) + m1_b[...]
    h = jnp.maximum(h, 0.0)
    h = jnp.maximum(dot(h, m2_w[...]) + m2_b[...], 0.0)
    q_ref[...] = (dot(h, m3_w[...]) + m3_b[...]).astype(q_ref.dtype)  # [B, 2]


def critic_forward(packed, graph, feats, action):
    """Fused forward of Critic.forward(state, action) -> (q1, q2)."""
    num_nodes = graph["num_nodes"]
    fx_dim = packed["ev_w"].shape[1]
    batch = action.shape[0]

    args = [
        feats["ev"], feats["cs"], feats["tr"], feats["env"],
        graph["a_norm"], graph["pool"], action,
        packed["ev_w"], packed["ev_b"], packed["cs_w"], packed["cs_b"],
        packed["tr_w"], packed["tr_b"], packed["env_w"], packed["env_b"],
        packed["gcn1_w"], packed["gcn1_b"], packed["gcn2_w"], packed["gcn2_b"],
        packed["gcn3_w"], packed["gcn3_b"],
        packed["m1s_w"], packed["m1a_w"], packed["m1_b"],
        packed["m2_w"], packed["m2_b"], packed["m3_w"], packed["m3_b"],
    ]
    vmem_spec = pl.BlockSpec(memory_space=pltpu.MemorySpace.VMEM)
    q = pl.pallas_call(
        functools.partial(_critic_fused_kernel,
                          type_counts=graph["type_counts"]),
        out_shape=jax.ShapeDtypeStruct((batch, 2), jnp.float32),
        in_specs=[vmem_spec] * len(args),
        out_specs=vmem_spec,
        scratch_shapes=[pltpu.VMEM((num_nodes, fx_dim), jnp.float32)],
    )(*args)
    return q[:, 0:1], q[:, 1:2]


# ---------------------------------------------------------------------------
# One-time glue: graph preprocessing & parameter packing
# ---------------------------------------------------------------------------
def build_norm_adj(edge_index, num_nodes):
    """Dense D^{-1/2}(A+I)D^{-1/2} with A[dst,src]=1 (so out = A_norm @ x)."""
    src = edge_index[0]
    dst = edge_index[1]
    loop = jnp.arange(num_nodes, dtype=src.dtype)
    src = jnp.concatenate([src, loop])
    dst = jnp.concatenate([dst, loop])
    deg = jnp.zeros((num_nodes,), jnp.float32).at[dst].add(1.0)
    dinv = jnp.where(deg > 0, 1.0 / jnp.sqrt(deg), 0.0)
    norm = dinv[src] * dinv[dst]
    return jnp.zeros((num_nodes, num_nodes), jnp.float32).at[dst, src].add(norm)


def build_pool_matrix(sample_node_length, num_nodes):
    """P[g, n] = 1/|graph g| if node n belongs to graph g (global_mean_pool)."""
    num_graphs = len(sample_node_length)
    batch = []
    for g, n in enumerate(sample_node_length):
        batch.extend([g] * n)
    batch = jnp.asarray(batch, jnp.int32)
    counts = jnp.asarray(sample_node_length, jnp.float32)
    onehot = (batch[None, :] == jnp.arange(num_graphs)[:, None]).astype(jnp.float32)
    return onehot / counts[:, None]


def prepare_graph(edge_index, sample_node_length,
                  ev_idx, cs_idx, tr_idx, env_idx, num_nodes):
    """Normalized adjacency + pool matrix, permuted so node types are
    contiguous row ranges.  Assumes the four index sets partition the nodes
    (same implicit assumption as the PyTorch module)."""
    a_norm = build_norm_adj(edge_index, num_nodes)
    pool = build_pool_matrix(sample_node_length, num_nodes)
    perm = jnp.concatenate([ev_idx, cs_idx, tr_idx, env_idx]).astype(jnp.int32)
    return {
        "a_norm": a_norm[perm][:, perm],
        "pool": pool[:, perm],
        "type_counts": (int(ev_idx.shape[0]), int(cs_idx.shape[0]),
                        int(tr_idx.shape[0]), int(env_idx.shape[0])),
        "num_nodes": num_nodes,
    }


def init_linear(key, fan_in, fan_out):
    """Deterministic init mimicking torch.nn.Linear default U(-1/sqrt(fi), .)."""
    kw, kb = jax.random.split(key)
    bound = 1.0 / jnp.sqrt(jnp.float32(fan_in))
    w = jax.random.uniform(kw, (fan_in, fan_out), jnp.float32, -bound, bound)
    b = jax.random.uniform(kb, (1, fan_out), jnp.float32, -bound, bound)
    return w, b


def init_critic_params(key, fx_node_sizes, fx_dim, gnn_hidden,
                       state_dim, action_dim, mlp_hidden):
    keys = jax.random.split(key, 13)
    p = {}
    p["ev_w"], p["ev_b"] = init_linear(keys[0], fx_node_sizes["ev"], fx_dim)
    p["cs_w"], p["cs_b"] = init_linear(keys[1], fx_node_sizes["cs"], fx_dim)
    p["tr_w"], p["tr_b"] = init_linear(keys[2], fx_node_sizes["tr"], fx_dim)
    p["env_w"], p["env_b"] = init_linear(keys[3], fx_node_sizes["env"], fx_dim)
    p["gcn1_w"], p["gcn1_b"] = init_linear(keys[4], fx_dim, gnn_hidden)
    p["gcn2_w"], p["gcn2_b"] = init_linear(keys[5], gnn_hidden, 2 * gnn_hidden)
    p["gcn3_w"], p["gcn3_b"] = init_linear(keys[6], 2 * gnn_hidden, 4 * gnn_hidden)
    sa_dim = state_dim + action_dim
    p["l1_w"], p["l1_b"] = init_linear(keys[7], sa_dim, mlp_hidden)
    p["l2_w"], p["l2_b"] = init_linear(keys[8], mlp_hidden, mlp_hidden)
    p["l3_w"], p["l3_b"] = init_linear(keys[9], mlp_hidden, 1)
    p["l4_w"], p["l4_b"] = init_linear(keys[10], sa_dim, mlp_hidden)
    p["l5_w"], p["l5_b"] = init_linear(keys[11], mlp_hidden, mlp_hidden)
    p["l6_w"], p["l6_b"] = init_linear(keys[12], mlp_hidden, 1)
    return p


def pack_critic_params(p, state_dim):
    """Pack both Q-heads into lane-dense / block-diagonal weights and split the
    first layer at the state/action boundary (numerically identical)."""
    H = p["l2_w"].shape[0]
    packed = {k: p[k] for k in
              ["ev_w", "ev_b", "cs_w", "cs_b", "tr_w", "tr_b", "env_w", "env_b",
               "gcn1_w", "gcn1_b", "gcn2_w", "gcn2_b", "gcn3_w", "gcn3_b"]}
    w1 = jnp.concatenate([p["l1_w"], p["l4_w"]], axis=1)           # [sa, 2H]
    packed["m1s_w"] = w1[:state_dim]
    packed["m1a_w"] = w1[state_dim:]
    packed["m1_b"] = jnp.concatenate([p["l1_b"], p["l4_b"]], axis=1)
    w2 = jnp.zeros((2 * H, 2 * H), jnp.float32)
    packed["m2_w"] = w2.at[:H, :H].set(p["l2_w"]).at[H:, H:].set(p["l5_w"])
    packed["m2_b"] = jnp.concatenate([p["l2_b"], p["l5_b"]], axis=1)
    w3 = jnp.zeros((2 * H, 2), jnp.float32)
    packed["m3_w"] = w3.at[:H, 0:1].set(p["l3_w"]).at[H:, 1:2].set(p["l6_w"])
    packed["m3_b"] = jnp.concatenate([p["l3_b"], p["l6_b"]], axis=1)
    return packed


# ---------------------------------------------------------------------------
# Plain-JAX reference (unfused, unpermuted) for correctness checking
# ---------------------------------------------------------------------------
def critic_reference(p, a_norm, pool, idxs, feats, action, num_nodes):
    fx_dim = p["ev_w"].shape[1]
    relu = lambda t: jnp.maximum(t, 0.0)
    emb = jnp.zeros((num_nodes, fx_dim), jnp.float32)
    emb = emb.at[idxs["ev"]].set(feats["ev"] @ p["ev_w"] + p["ev_b"])
    emb = emb.at[idxs["cs"]].set(feats["cs"] @ p["cs_w"] + p["cs_b"])
    emb = emb.at[idxs["tr"]].set(feats["tr"] @ p["tr_w"] + p["tr_b"])
    emb = emb.at[idxs["env"]].set(feats["env"] @ p["env_w"] + p["env_b"])
    x = relu(a_norm @ (emb @ p["gcn1_w"]) + p["gcn1_b"])
    x = relu(a_norm @ (x @ p["gcn2_w"]) + p["gcn2_b"])
    x = relu(a_norm @ (x @ p["gcn3_w"]) + p["gcn3_b"])
    sa = jnp.concatenate([pool @ x, action], axis=1)
    q1 = relu(sa @ p["l1_w"] + p["l1_b"])
    q1 = relu(q1 @ p["l2_w"] + p["l2_b"])
    q1 = q1 @ p["l3_w"] + p["l3_b"]
    q2 = relu(sa @ p["l4_w"] + p["l4_b"])
    q2 = relu(q2 @ p["l5_w"] + p["l5_b"])
    q2 = q2 @ p["l6_w"] + p["l6_b"]
    return q1, q2


# ---------------------------------------------------------------------------
# Example run
# ---------------------------------------------------------------------------
if __name__ == "__main__":
    # Small, deterministic configuration.
    fx_node_sizes = {"ev": 5, "cs": 6, "tr": 7, "env": 4}
    fx_dim = 8
    gnn_hidden = 16                     # -> GCN dims 16, 32, 64
    state_dim = 4 * gnn_hidden          # pooled embedding dim = 64
    action_dim = 8
    mlp_hidden = 64
    sample_node_length = [6, 6]         # two graphs in the batch
    num_nodes = sum(sample_node_length)
    batch = len(sample_node_length)

    key = jax.random.PRNGKey(0)
    k_param, k_ev, k_cs, k_tr, k_env, k_act = jax.random.split(key, 6)

    raw_params = init_critic_params(k_param, fx_node_sizes, fx_dim, gnn_hidden,
                                    state_dim, action_dim, mlp_hidden)
    packed_params = pack_critic_params(raw_params, state_dim)

    # Node-type partition of the 12 nodes (per graph: 2 ev, 2 cs, 1 tr, 1 env).
    ev_indexes = jnp.asarray([0, 1, 6, 7], jnp.int32)
    cs_indexes = jnp.asarray([2, 3, 8, 9], jnp.int32)
    tr_indexes = jnp.asarray([4, 10], jnp.int32)
    env_indexes = jnp.asarray([5, 11], jnp.int32)

    feats = {
        "ev": jax.random.normal(k_ev, (4, fx_node_sizes["ev"]), jnp.float32),
        "cs": jax.random.normal(k_cs, (4, fx_node_sizes["cs"]), jnp.float32),
        "tr": jax.random.normal(k_tr, (2, fx_node_sizes["tr"]), jnp.float32),
        "env": jax.random.normal(k_env, (2, fx_node_sizes["env"]), jnp.float32),
    }

    # Undirected chain within each graph.
    e0 = [(0, 1), (1, 2), (2, 3), (3, 4), (4, 5)]
    edges = []
    for s, d in e0:
        edges += [(s, d), (d, s), (s + 6, d + 6), (d + 6, s + 6)]
    edge_index = jnp.asarray(edges, jnp.int32).T   # [2, E]

    graph = prepare_graph(edge_index, sample_node_length,
                          ev_indexes, cs_indexes, tr_indexes, env_indexes,
                          num_nodes)

    action = jax.random.normal(k_act, (batch, action_dim), jnp.float32)

    q1, q2 = critic_forward(packed_params, graph, feats, action)
    jax.block_until_ready((q1, q2))
    assert q1.shape == (batch, 1) and q2.shape == (batch, 1)

    # Correctness vs. the direct (unfused) formulation.
    r1, r2 = critic_reference(
        raw_params, build_norm_adj(edge_index, num_nodes),
        build_pool_matrix(sample_node_length, num_nodes),
        {"ev": ev_indexes, "cs": cs_indexes, "tr": tr_indexes, "env": env_indexes},
        feats, action, num_nodes)
    assert jnp.allclose(q1, r1, rtol=1e-2, atol=1e-2)
    assert jnp.allclose(q2, r2, rtol=1e-2, atol=1e-2)

    print("KERNEL_OK")
</pallas_src>

<mosaic_0001>
module attributes {stable_mosaic.version = 11 : i64} {
  func.func @_critic_fused_kernel(%arg0: memref<4x5xf32, #tpu.memory_space<vmem>>, %arg1: memref<4x6xf32, #tpu.memory_space<vmem>>, %arg2: memref<2x7xf32, #tpu.memory_space<vmem>>, %arg3: memref<2x4xf32, #tpu.memory_space<vmem>>, %arg4: memref<12x12xf32, #tpu.memory_space<vmem>>, %arg5: memref<2x12xf32, #tpu.memory_space<vmem>>, %arg6: memref<2x8xf32, #tpu.memory_space<vmem>>, %arg7: memref<5x8xf32, #tpu.memory_space<vmem>>, %arg8: memref<1x8xf32, #tpu.memory_space<vmem>>, %arg9: memref<6x8xf32, #tpu.memory_space<vmem>>, %arg10: memref<1x8xf32, #tpu.memory_space<vmem>>, %arg11: memref<7x8xf32, #tpu.memory_space<vmem>>, %arg12: memref<1x8xf32, #tpu.memory_space<vmem>>, %arg13: memref<4x8xf32, #tpu.memory_space<vmem>>, %arg14: memref<1x8xf32, #tpu.memory_space<vmem>>, %arg15: memref<8x16xf32, #tpu.memory_space<vmem>>, %arg16: memref<1x16xf32, #tpu.memory_space<vmem>>, %arg17: memref<16x32xf32, #tpu.memory_space<vmem>>, %arg18: memref<1x32xf32, #tpu.memory_space<vmem>>, %arg19: memref<32x64xf32, #tpu.memory_space<vmem>>, %arg20: memref<1x64xf32, #tpu.memory_space<vmem>>, %arg21: memref<64x128xf32, #tpu.memory_space<vmem>>, %arg22: memref<8x128xf32, #tpu.memory_space<vmem>>, %arg23: memref<1x128xf32, #tpu.memory_space<vmem>>, %arg24: memref<128x128xf32, #tpu.memory_space<vmem>>, %arg25: memref<1x128xf32, #tpu.memory_space<vmem>>, %arg26: memref<128x2xf32, #tpu.memory_space<vmem>>, %arg27: memref<1x2xf32, #tpu.memory_space<vmem>>, %arg28: memref<2x2xf32, #tpu.memory_space<vmem>>, %arg29: memref<12x8xf32, #tpu.memory_space<vmem>>) attributes {dimension_semantics = [], scalar_prefetch = 0 : i64, scratch_operands = 1 : i64, tpu.core_type = #tpu.core_type<tc>} {
    %c0 = arith.constant 0 : index
    %c0_0 = arith.constant 0 : index
    %0 = vector.load %arg0[%c0, %c0_0] : memref<4x5xf32, #tpu.memory_space<vmem>>, vector<4x5xf32>
    %c0_1 = arith.constant 0 : index
    %c0_2 = arith.constant 0 : index
    %1 = vector.load %arg7[%c0_1, %c0_2] : memref<5x8xf32, #tpu.memory_space<vmem>>, vector<5x8xf32>
    %cst = arith.constant dense<0.000000e+00> : vector<4x8xf32>
    %2 = tpu.matmul %0, %1, %cst {dimension_numbers = #tpu.dot_dimension_numbers<[1], [0], [0], [1], [0, 0, 1, 1], [], []>} : vector<4x5xf32>, vector<5x8xf32>, vector<4x8xf32> -> vector<4x8xf32>
    %c0_3 = arith.constant 0 : index
    %c0_4 = arith.constant 0 : index
    %3 = vector.load %arg8[%c0_3, %c0_4] : memref<1x8xf32, #tpu.memory_space<vmem>>, vector<1x8xf32>
    %4 = vector.broadcast %3 : vector<1x8xf32> to vector<4x8xf32>
    %5 = arith.addf %2, %4 : vector<4x8xf32>
    %c0_5 = arith.constant 0 : index
    %c0_6 = arith.constant 0 : index
    %6 = vector.load %arg29[%c0_5, %c0_6] : memref<12x8xf32, #tpu.memory_space<vmem>>, vector<4x8xf32>
    tpu.vector_store %arg29[%c0_5, %c0_6], %5 {strides = array<i32>} : memref<12x8xf32, #tpu.memory_space<vmem>>, vector<4x8xf32>,
    %c0_7 = arith.constant 0 : index
    %c0_8 = arith.constant 0 : index
    %7 = vector.load %arg1[%c0_7, %c0_8] : memref<4x6xf32, #tpu.memory_space<vmem>>, vector<4x6xf32>
    %c0_9 = arith.constant 0 : index
    %c0_10 = arith.constant 0 : index
    %8 = vector.load %arg9[%c0_9, %c0_10] : memref<6x8xf32, #tpu.memory_space<vmem>>, vector<6x8xf32>
    %cst_11 = arith.constant dense<0.000000e+00> : vector<4x8xf32>
    %9 = tpu.matmul %7, %8, %cst_11 {dimension_numbers = #tpu.dot_dimension_numbers<[1], [0], [0], [1], [0, 0, 1, 1], [], []>} : vector<4x6xf32>, vector<6x8xf32>, vector<4x8xf32> -> vector<4x8xf32>
    %c0_12 = arith.constant 0 : index
    %c0_13 = arith.constant 0 : index
    %10 = vector.load %arg10[%c0_12, %c0_13] : memref<1x8xf32, #tpu.memory_space<vmem>>, vector<1x8xf32>
    %11 = vector.broadcast %10 : vector<1x8xf32> to vector<4x8xf32>
    %12 = arith.addf %9, %11 : vector<4x8xf32>
    %c4 = arith.constant 4 : index
    %c0_14 = arith.constant 0 : index
    %13 = vector.load %arg29[%c4, %c0_14] : memref<12x8xf32, #tpu.memory_space<vmem>>, vector<4x8xf32>
    tpu.vector_store %arg29[%c4, %c0_14], %12 {strides = array<i32>} : memref<12x8xf32, #tpu.memory_space<vmem>>, vector<4x8xf32>,
    %c0_15 = arith.constant 0 : index
    %c0_16 = arith.constant 0 : index
    %14 = vector.load %arg2[%c0_15, %c0_16] : memref<2x7xf32, #tpu.memory_space<vmem>>, vector<2x7xf32>
    %c0_17 = arith.constant 0 : index
    %c0_18 = arith.constant 0 : index
    %15 = vector.load %arg11[%c0_17, %c0_18] : memref<7x8xf32, #tpu.memory_space<vmem>>, vector<7x8xf32>
    %cst_19 = arith.constant dense<0.000000e+00> : vector<2x8xf32>
    %16 = tpu.matmul %14, %15, %cst_19 {dimension_numbers = #tpu.dot_dimension_numbers<[1], [0], [0], [1], [0, 0, 1, 1], [], []>} : vector<2x7xf32>, vector<7x8xf32>, vector<2x8xf32> -> vector<2x8xf32>
    %c0_20 = arith.constant 0 : index
    %c0_21 = arith.constant 0 : index
    %17 = vector.load %arg12[%c0_20, %c0_21] : memref<1x8xf32, #tpu.memory_space<vmem>>, vector<1x8xf32>
    %18 = vector.broadcast %17 : vector<1x8xf32> to vector<2x8xf32>
    %19 = arith.addf %16, %18 : vector<2x8xf32>
    %c8 = arith.constant 8 : index
    %c0_22 = arith.constant 0 : index
    %20 = vector.load %arg29[%c8, %c0_22] : memref<12x8xf32, #tpu.memory_space<vmem>>, vector<2x8xf32>
    tpu.vector_store %arg29[%c8, %c0_22], %19 {strides = array<i32>} : memref<12x8xf32, #tpu.memory_space<vmem>>, vector<2x8xf32>,
    %c0_23 = arith.constant 0 : index
    %c0_24 = arith.constant 0 : index
    %21 = vector.load %arg3[%c0_23, %c0_24] : memref<2x4xf32, #tpu.memory_space<vmem>>, vector<2x4xf32>
    %c0_25 = arith.constant 0 : index
    %c0_26 = arith.constant 0 : index
    %22 = vector.load %arg13[%c0_25, %c0_26] : memref<4x8xf32, #tpu.memory_space<vmem>>, vector<4x8xf32>
    %cst_27 = arith.constant dense<0.000000e+00> : vector<2x8xf32>
    %23 = tpu.matmul %21, %22, %cst_27 {dimension_numbers = #tpu.dot_dimension_numbers<[1], [0], [0], [1], [0, 0, 1, 1], [], []>} : vector<2x4xf32>, vector<4x8xf32>, vector<2x8xf32> -> vector<2x8xf32>
    %c0_28 = arith.constant 0 : index
    %c0_29 = arith.constant 0 : index
    %24 = vector.load %arg14[%c0_28, %c0_29] : memref<1x8xf32, #tpu.memory_space<vmem>>, vector<1x8xf32>
    %25 = vector.broadcast %24 : vector<1x8xf32> to vector<2x8xf32>
    %26 = arith.addf %23, %25 : vector<2x8xf32>
    %c10 = arith.constant 10 : index
    %c0_30 = arith.constant 0 : index
    %27 = vector.load %arg29[%c10, %c0_30] : memref<12x8xf32, #tpu.memory_space<vmem>>, vector<2x8xf32>
    tpu.vector_store %arg29[%c10, %c0_30], %26 {strides = array<i32>} : memref<12x8xf32, #tpu.memory_space<vmem>>, vector<2x8xf32>,
    %c0_31 = arith.constant 0 : index
    %c0_32 = arith.constant 0 : index
    %28 = vector.load %arg4[%c0_31, %c0_32] : memref<12x12xf32, #tpu.memory_space<vmem>>, vector<12x12xf32>
    %c0_33 = arith.constant 0 : index
    %c0_34 = arith.constant 0 : index
    %29 = vector.load %arg29[%c0_33, %c0_34] : memref<12x8xf32, #tpu.memory_space<vmem>>, vector<12x8xf32>
    %c0_35 = arith.constant 0 : index
    %c0_36 = arith.constant 0 : index
    %30 = vector.load %arg15[%c0_35, %c0_36] : memref<8x16xf32, #tpu.memory_space<vmem>>, vector<8x16xf32>
    %cst_37 = arith.constant dense<0.000000e+00> : vector<12x16xf32>
    %31 = tpu.matmul %29, %30, %cst_37 {dimension_numbers = #tpu.dot_dimension_numbers<[1], [0], [0], [1], [0, 0, 1, 1], [], []>} : vector<12x8xf32>, vector<8x16xf32>, vector<12x16xf32> -> vector<12x16xf32>
    %cst_38 = arith.constant dense<0.000000e+00> : vector<12x16xf32>
    %32 = tpu.matmul %28, %31, %cst_38 {dimension_numbers = #tpu.dot_dimension_numbers<[1], [0], [0], [1], [0, 0, 1, 1], [], []>} : vector<12x12xf32>, vector<12x16xf32>, vector<12x16xf32> -> vector<12x16xf32>
    %c0_39 = arith.constant 0 : index
    %c0_40 = arith.constant 0 : index
    %33 = vector.load %arg16[%c0_39, %c0_40] : memref<1x16xf32, #tpu.memory_space<vmem>>, vector<1x16xf32>
    %34 = vector.broadcast %33 : vector<1x16xf32> to vector<12x16xf32>
    %35 = arith.addf %32, %34 : vector<12x16xf32>
    %cst_41 = arith.constant 0.000000e+00 : f32
    %36 = vector.broadcast %cst_41 : f32 to vector<12x16xf32>
    %37 = arith.maximumf %35, %36 : vector<12x16xf32>
    %c0_42 = arith.constant 0 : index
    %c0_43 = arith.constant 0 : index
    %38 = vector.load %arg17[%c0_42, %c0_43] : memref<16x32xf32, #tpu.memory_space<vmem>>, vector<16x32xf32>
    %cst_44 = arith.constant dense<0.000000e+00> : vector<12x32xf32>
    %39 = tpu.matmul %37, %38, %cst_44 {dimension_numbers = #tpu.dot_dimension_numbers<[1], [0], [0], [1], [0, 0, 1, 1], [], []>} : vector<12x16xf32>, vector<16x32xf32>, vector<12x32xf32> -> vector<12x32xf32>
    %cst_45 = arith.constant dense<0.000000e+00> : vector<12x32xf32>
    %40 = tpu.matmul %28, %39, %cst_45 {dimension_numbers = #tpu.dot_dimension_numbers<[1], [0], [0], [1], [0, 0, 1, 1], [], []>} : vector<12x12xf32>, vector<12x32xf32>, vector<12x32xf32> -> vector<12x32xf32>
    %c0_46 = arith.constant 0 : index
    %c0_47 = arith.constant 0 : index
    %41 = vector.load %arg18[%c0_46, %c0_47] : memref<1x32xf32, #tpu.memory_space<vmem>>, vector<1x32xf32>
    %42 = vector.broadcast %41 : vector<1x32xf32> to vector<12x32xf32>
    %43 = arith.addf %40, %42 : vector<12x32xf32>
    %cst_48 = arith.constant 0.000000e+00 : f32
    %44 = vector.broadcast %cst_48 : f32 to vector<12x32xf32>
    %45 = arith.maximumf %43, %44 : vector<12x32xf32>
    %c0_49 = arith.constant 0 : index
    %c0_50 = arith.constant 0 : index
    %46 = vector.load %arg19[%c0_49, %c0_50] : memref<32x64xf32, #tpu.memory_space<vmem>>, vector<32x64xf32>
    %cst_51 = arith.constant dense<0.000000e+00> : vector<12x64xf32>
    %47 = tpu.matmul %45, %46, %cst_51 {dimension_numbers = #tpu.dot_dimension_numbers<[1], [0], [0], [1], [0, 0, 1, 1], [], []>} : vector<12x32xf32>, vector<32x64xf32>, vector<12x64xf32> -> vector<12x64xf32>
    %cst_52 = arith.constant dense<0.000000e+00> : vector<12x64xf32>
    %48 = tpu.matmul %28, %47, %cst_52 {dimension_numbers = #tpu.dot_dimension_numbers<[1], [0], [0], [1], [0, 0, 1, 1], [], []>} : vector<12x12xf32>, vector<12x64xf32>, vector<12x64xf32> -> vector<12x64xf32>
    %c0_53 = arith.constant 0 : index
    %c0_54 = arith.constant 0 : index
    %49 = vector.load %arg20[%c0_53, %c0_54] : memref<1x64xf32, #tpu.memory_space<vmem>>, vector<1x64xf32>
    %50 = vector.broadcast %49 : vector<1x64xf32> to vector<12x64xf32>
    %51 = arith.addf %48, %50 : vector<12x64xf32>
    %cst_55 = arith.constant 0.000000e+00 : f32
    %52 = vector.broadcast %cst_55 : f32 to vector<12x64xf32>
    %53 = arith.maximumf %51, %52 : vector<12x64xf32>
    %c0_56 = arith.constant 0 : index
    %c0_57 = arith.constant 0 : index
    %54 = vector.load %arg5[%c0_56, %c0_57] : memref<2x12xf32, #tpu.memory_space<vmem>>, vector<2x12xf32>
    %cst_58 = arith.constant dense<0.000000e+00> : vector<2x64xf32>
    %55 = tpu.matmul %54, %53, %cst_58 {dimension_numbers = #tpu.dot_dimension_numbers<[1], [0], [0], [1], [0, 0, 1, 1], [], []>} : vector<2x12xf32>, vector<12x64xf32>, vector<2x64xf32> -> vector<2x64xf32>
    %c0_59 = arith.constant 0 : index
    %c0_60 = arith.constant 0 : index
    %56 = vector.load %arg21[%c0_59, %c0_60] : memref<64x128xf32, #tpu.memory_space<vmem>>, vector<64x128xf32>
    %cst_61 = arith.constant dense<0.000000e+00> : vector<2x128xf32>
    %57 = tpu.matmul %55, %56, %cst_61 {dimension_numbers = #tpu.dot_dimension_numbers<[1], [0], [0], [1], [0, 0, 1, 1], [], []>} : vector<2x64xf32>, vector<64x128xf32>, vector<2x128xf32> -> vector<2x128xf32>
    %c0_62 = arith.constant 0 : index
    %c0_63 = arith.constant 0 : index
    %58 = vector.load %arg6[%c0_62, %c0_63] : memref<2x8xf32, #tpu.memory_space<vmem>>, vector<2x8xf32>
    %c0_64 = arith.constant 0 : index
    %c0_65 = arith.constant 0 : index
    %59 = vector.load %arg22[%c0_64, %c0_65] : memref<8x128xf32, #tpu.memory_space<vmem>>, vector<8x128xf32>
    %cst_66 = arith.constant dense<0.000000e+00> : vector<2x128xf32>
    %60 = tpu.matmul %58, %59, %cst_66 {dimension_numbers = #tpu.dot_dimension_numbers<[1], [0], [0], [1], [0, 0, 1, 1], [], []>} : vector<2x8xf32>, vector<8x128xf32>, vector<2x128xf32> -> vector<2x128xf32>
    %61 = arith.addf %57, %60 : vector<2x128xf32>
    %c0_67 = arith.constant 0 : index
    %c0_68 = arith.constant 0 : index
    %62 = vector.load %arg23[%c0_67, %c0_68] : memref<1x128xf32, #tpu.memory_space<vmem>>, vector<1x128xf32>
    %63 = vector.broadcast %62 : vector<1x128xf32> to vector<2x128xf32>
    %64 = arith.addf %61, %63 : vector<2x128xf32>
    %cst_69 = arith.constant 0.000000e+00 : f32
    %65 = vector.broadcast %cst_69 : f32 to vector<2x128xf32>
    %66 = arith.maximumf %64, %65 : vector<2x128xf32>
    %c0_70 = arith.constant 0 : index
    %c0_71 = arith.constant 0 : index
    %67 = vector.load %arg24[%c0_70, %c0_71] : memref<128x128xf32, #tpu.memory_space<vmem>>, vector<128x128xf32>
    %cst_72 = arith.constant dense<0.000000e+00> : vector<2x128xf32>
    %68 = tpu.matmul %66, %67, %cst_72 {dimension_numbers = #tpu.dot_dimension_numbers<[1], [0], [0], [1], [0, 0, 1, 1], [], []>} : vector<2x128xf32>, vector<128x128xf32>, vector<2x128xf32> -> vector<2x128xf32>
    %c0_73 = arith.constant 0 : index
    %c0_74 = arith.constant 0 : index
    %69 = vector.load %arg25[%c0_73, %c0_74] : memref<1x128xf32, #tpu.memory_space<vmem>>, vector<1x128xf32>
    %70 = vector.broadcast %69 : vector<1x128xf32> to vector<2x128xf32>
    %71 = arith.addf %68, %70 : vector<2x128xf32>
    %cst_75 = arith.constant 0.000000e+00 : f32
    %72 = vector.broadcast %cst_75 : f32 to vector<2x128xf32>
    %73 = arith.maximumf %71, %72 : vector<2x128xf32>
    %c0_76 = arith.constant 0 : index
    %c0_77 = arith.constant 0 : index
    %74 = vector.load %arg26[%c0_76, %c0_77] : memref<128x2xf32, #tpu.memory_space<vmem>>, vector<128x2xf32>
    %cst_78 = arith.constant dense<0.000000e+00> : vector<2x2xf32>
    %75 = tpu.matmul %73, %74, %cst_78 {dimension_numbers = #tpu.dot_dimension_numbers<[1], [0], [0], [1], [0, 0, 1, 1], [], []>} : vector<2x128xf32>, vector<128x2xf32>, vector<2x2xf32> -> vector<2x2xf32>
    %c0_79 = arith.constant 0 : index
    %c0_80 = arith.constant 0 : index
    %76 = vector.load %arg27[%c0_79, %c0_80] : memref<1x2xf32, #tpu.memory_space<vmem>>, vector<1x2xf32>
    %77 = vector.broadcast %76 : vector<1x2xf32> to vector<2x2xf32>
    %78 = arith.addf %75, %77 : vector<2x2xf32>
    %c0_81 = arith.constant 0 : index
    %c0_82 = arith.constant 0 : index
    %79 = vector.load %arg28[%c0_81, %c0_82] : memref<2x2xf32, #tpu.memory_space<vmem>>, vector<2x2xf32>
    tpu.vector_store %arg28[%c0_81, %c0_82], %78 {strides = array<i32>} : memref<2x2xf32, #tpu.memory_space<vmem>>, vector<2x2xf32>,
    return
  }
}

</mosaic_0001>

<llo_original>
// kernel: tpu_custom_call.1
$region0: #{tpu_custom_call.1}
  #allocation0 [shape = 'u32[]', space=smem, size = 0x4, offset = 0x4, fixed_abs, tag = 'smem constant byte address 0x4 - core index']
  #allocation1 [shape = 'u32[144,128]{1,0:T(1,128)}', space=vmem, size = 0x12000, scoped, tag = 'internal scratch']
  #allocation2 [shape = 'f32[12,8]{1,0:T(8,128)}', space=vmem, size = 0x2000, scoped, tag = 'scratch operand']
  %s0 = inlined_call_operand.vmem [shape: f32[4,5], index: 0, kind: input, shape index: {}]
  %s1 = inlined_call_operand.hbm [shape: f32[4,6], index: 1, kind: input, shape index: {}]
  %s2 = inlined_call_operand.hbm [shape: f32[2,7], index: 2, kind: input, shape index: {}]
  %s3 = inlined_call_operand.hbm [shape: f32[2,4], index: 3, kind: input, shape index: {}]
  %s4 = inlined_call_operand.hbm [shape: f32[12,12], index: 4, kind: input, shape index: {}]
  %s5 = inlined_call_operand.hbm [shape: f32[2,12], index: 5, kind: input, shape index: {}]
  %s6 = inlined_call_operand.hbm [shape: f32[2,8], index: 6, kind: input, shape index: {}]
  %s7 = inlined_call_operand.vmem [shape: f32[5,8], index: 7, kind: input, shape index: {}]
  %s8 = inlined_call_operand.vmem [shape: f32[1,8], index: 8, kind: input, shape index: {}]
  %s9 = inlined_call_operand.hbm [shape: f32[6,8], index: 9, kind: input, shape index: {}]
  %s10 = inlined_call_operand.hbm [shape: f32[1,8], index: 10, kind: input, shape index: {}]
  %s11 = inlined_call_operand.hbm [shape: f32[7,8], index: 11, kind: input, shape index: {}]
  %s12 = inlined_call_operand.hbm [shape: f32[1,8], index: 12, kind: input, shape index: {}]
  %s13 = inlined_call_operand.hbm [shape: f32[4,8], index: 13, kind: input, shape index: {}]
  %s14 = inlined_call_operand.hbm [shape: f32[1,8], index: 14, kind: input, shape index: {}]
  %s15 = inlined_call_operand.hbm [shape: f32[8,16], index: 15, kind: input, shape index: {}]
  %s16 = inlined_call_operand.hbm [shape: f32[1,16], index: 16, kind: input, shape index: {}]
  %s17 = inlined_call_operand.hbm [shape: f32[16,32], index: 17, kind: input, shape index: {}]
  %s18 = inlined_call_operand.hbm [shape: f32[1,32], index: 18, kind: input, shape index: {}]
  %s19 = inlined_call_operand.vmem [shape: f32[32,64], index: 19, kind: input, shape index: {}]
  %s20 = inlined_call_operand.hbm [shape: f32[1,64], index: 20, kind: input, shape index: {}]
  %s21 = inlined_call_operand.hbm [shape: f32[64,128], index: 21, kind: input, shape index: {}]
  %s22 = inlined_call_operand.hbm [shape: f32[8,128], index: 22, kind: input, shape index: {}]
  %s23 = inlined_call_operand.hbm [shape: f32[1,128], index: 23, kind: input, shape index: {}]
  %s24 = inlined_call_operand.vmem [shape: f32[128,128], index: 24, kind: input, shape index: {}]
  %s25 = inlined_call_operand.hbm [shape: f32[1,128], index: 25, kind: input, shape index: {}]
  %s26 = inlined_call_operand.vmem [shape: f32[128,2], index: 26, kind: input, shape index: {}]
  %s27 = inlined_call_operand.vmem [shape: f32[1,2], index: 27, kind: input, shape index: {}]
  %s28 = inlined_call_operand.hbm [shape: f32[2,2], index: 28, kind: output, shape index: {}]
  %s29 = sld [smem:[#allocation0]]
  $region206: #{tpu_custom_call.1} parent=0
    _
  %s31 = ssub.s32 1, %s29
  %s32 = scalar_select 0, %s31, %s29
  $region1: #{tpu_custom_call.1} parent=0
    #allocation3 [shape = 'u8[2048]{0}', space=vmem, size = 0x800, scoped, tag = 'input window, operand 1, single buffered']
    #allocation4 [shape = 's32[1]{0}', space=sflag, size = 0x4, scoped, tag = 'scoped memory for tpu_custom_call.1']
    #allocation5 [shape = 's32[1]{0}', space=sflag, size = 0x4, scoped, tag = 'scoped memory for tpu_custom_call.1']
    #allocation6 [shape = 'u8[1024]{0}', space=vmem, size = 0x400, scoped, tag = 'input window, operand 2, single buffered']
    #allocation7 [shape = 's32[1]{0}', space=sflag, size = 0x4, scoped, tag = 'scoped memory for tpu_custom_call.1']
    #allocation8 [shape = 'u8[1024]{0}', space=vmem, size = 0x400, scoped, tag = 'input window, operand 3, single buffered']
    #allocation9 [shape = 'u8[8192]{0}', space=vmem, size = 0x2000, scoped, tag = 'input window, operand 4, single buffered']
    #allocation10 [shape = 's32[1]{0}', space=sflag, size = 0x4, scoped, tag = 'scoped memory for tpu_custom_call.1']
    #allocation11 [shape = 'u8[1024]{0}', space=vmem, size = 0x400, scoped, tag = 'input window, operand 5, single buffered']
    #allocation12 [shape = 'u8[1024]{0}', space=vmem, size = 0x400, scoped, tag = 'input window, operand 6, single buffered']
    #allocation13 [shape = 's32[1]{0}', space=sflag, size = 0x4, scoped, tag = 'scoped memory for tpu_custom_call.1']
    #allocation14 [shape = 'u8[4096]{0}', space=vmem, size = 0x1000, scoped, tag = 'input window, operand 9, single buffered']
    #allocation15 [shape = 'u8[512]{0}', space=vmem, size = 0x400, scoped, tag = 'input window, operand 10, single buffered']
    #allocation16 [shape = 's32[1]{0}', space=sflag, size = 0x4, scoped, tag = 'scoped memory for tpu_custom_call.1']
    #allocation17 [shape = 'u8[4096]{0}', space=vmem, size = 0x1000, scoped, tag = 'input window, operand 11, single buffered']
    #allocation18 [shape = 'u8[512]{0}', space=vmem, size = 0x400, scoped, tag = 'input window, operand 12, single buffered']
    #allocation19 [shape = 's32[1]{0}', space=sflag, size = 0x4, scoped, tag = 'scoped memory for tpu_custom_call.1']
    #allocation20 [shape = 'u8[2048]{0}', space=vmem, size = 0x800, scoped, tag = 'input window, operand 13, single buffered']
    #allocation21 [shape = 'u8[512]{0}', space=vmem, size = 0x400, scoped, tag = 'input window, operand 14, single buffered']
    #allocation22 [shape = 's32[1]{0}', space=sflag, size = 0x4, scoped, tag = 'scoped memory for tpu_custom_call.1']
    #allocation23 [shape = 'u8[4096]{0}', space=vmem, size = 0x1000, scoped, tag = 'input window, operand 15, single buffered']
    #allocation24 [shape = 'u8[512]{0}', space=vmem, size = 0x400, scoped, tag = 'input window, operand 16, single buffered']
    #allocation25 [shape = 's32[1]{0}', space=sflag, size = 0x4, scoped, tag = 'scoped memory for tpu_custom_call.1']
    #allocation26 [shape = 'u8[8192]{0}', space=vmem, size = 0x2000, scoped, tag = 'input window, operand 17, single buffered']
    #allocation27 [shape = 'u8[512]{0}', space=vmem, size = 0x400, scoped, tag = 'input window, operand 18, single buffered']
    #allocation28 [shape = 's32[1]{0}', space=sflag, size = 0x4, scoped, tag = 'scoped memory for tpu_custom_call.1']
    #allocation29 [shape = 'u8[512]{0}', space=vmem, size = 0x400, scoped, tag = 'input window, operand 20, single buffered']
    #allocation30 [shape = 'u8[32768]{0}', space=vmem, size = 0x8000, scoped, tag = 'input window, operand 21, single buffered']
    #allocation31 [shape = 's32[1]{0}', space=sflag, size = 0x4, scoped, tag = 'scoped memory for tpu_custom_call.1']
    #allocation32 [shape = 'u8[4096]{0}', space=vmem, size = 0x1000, scoped, tag = 'input window, operand 22, single buffered']
    #allocation33 [shape = 'u8[512]{0}', space=vmem, size = 0x400, scoped, tag = 'input window, operand 23, single buffered']
    #allocation34 [shape = 's32[1]{0}', space=sflag, size = 0x4, scoped, tag = 'scoped memory for tpu_custom_call.1']
    #allocation35 [shape = 'u8[512]{0}', space=vmem, size = 0x400, scoped, tag = 'input window, operand 25, single buffered']
    #allocation36 [shape = 'u8[1024]{0}', space=vmem, size = 0x400, scoped, tag = 'output window, operand 0, single buffered']
    %33 = vsyncpa [#allocation4], 0
    %34 = vsyncpa [#allocation7], 0
    %35 = vsyncpa [#allocation10], 0
    %36 = vsyncpa [#allocation13], 0
    %37 = vsyncpa [#allocation16], 0
    %38 = vsyncpa [#allocation19], 0
    %39 = vsyncpa [#allocation22], 0
    %40 = vsyncpa [#allocation25], 0
    %41 = vsyncpa [#allocation28], 0
    %42 = vsyncpa [#allocation31], 0
    %43 = vsyncpa [#allocation34], 0
    %44 = vsyncpa [#allocation5], 0
    // Predicated region
    $region2: #{tpu_custom_call.1} parent=1 // pred_check
      _
    $region3: #{tpu_custom_call.1} parent=1 // pred_check_branch
      %46 = sbr.rel (0) target = $region5
    $region4: #{tpu_custom_call.1} parent=1 // pred_region
      _
    $region5: #{tpu_custom_call.1} parent=1 // pred_fallthru
      _
    // Predicated region
    $region6: #{tpu_custom_call.1} parent=1 // pred_check
      _
    $region7: #{tpu_custom_call.1} parent=1 // pred_check_branch
      %48 = sbr.rel (0) target = $region9
    $region8: #{tpu_custom_call.1} parent=1 // pred_region
      %s50 = ssub.s32 64, 64
      %51 = vsyncadd [#allocation4], %s50
      %s53 = sshll.u32 [#allocation3], 4
      %s54 = int_to_ptr.vmem [resolvable:$true] %s53
      %56 = dma.hbm_to_vmem [thread:$0]  %s1, 64, %s54, [#allocation4]
    $region9: #{tpu_custom_call.1} parent=1 // pred_fallthru
      _
    // Predicated region
    $region10: #{tpu_custom_call.1} parent=1 // pred_check
      _
    $region11: #{tpu_custom_call.1} parent=1 // pred_check_branch
      %58 = sbr.rel (0) target = $region13
    $region12: #{tpu_custom_call.1} parent=1 // pred_region
      %s60 = ssub.s32 32, 32
      %61 = vsyncadd [#allocation7], %s60
      %s63 = sshll.u32 [#allocation6], 4
      %s64 = int_to_ptr.vmem [resolvable:$true] %s63
      %66 = dma.hbm_to_vmem [thread:$0]  %s2, 32, %s64, [#allocation7]
    $region13: #{tpu_custom_call.1} parent=1 // pred_fallthru
      _
    // Predicated region
    $region14: #{tpu_custom_call.1} parent=1 // pred_check
      _
    $region15: #{tpu_custom_call.1} parent=1 // pred_check_branch
      %68 = sbr.rel (0) target = $region17
    $region16: #{tpu_custom_call.1} parent=1 // pred_region
      %s70 = ssub.s32 32, 32
      %71 = vsyncadd [#allocation7], %s70
      %s73 = sshll.u32 [#allocation8], 4
      %s74 = int_to_ptr.vmem [resolvable:$true] %s73
      %76 = dma.hbm_to_vmem [thread:$0]  %s3, 32, %s74, [#allocation7]
    $region17: #{tpu_custom_call.1} parent=1 // pred_fallthru
      _
    // Predicated region
    $region18: #{tpu_custom_call.1} parent=1 // pred_check
      _
    $region19: #{tpu_custom_call.1} parent=1 // pred_check_branch
      %78 = sbr.rel (0) target = $region21
    $region20: #{tpu_custom_call.1} parent=1 // pred_region
      %s80 = ssub.s32 256, 256
      %81 = vsyncadd [#allocation10], %s80
      %s82 = sshll.u32 [#allocation9], 4
      %s83 = int_to_ptr.vmem [resolvable:$true] %s82
      %88 = dma.hbm_to_vmem [thread:$0]  %s4, 256, %s83, [#allocation10], 128, 128, 8
    $region21: #{tpu_custom_call.1} parent=1 // pred_fallthru
      _
    // Predicated region
    $region22: #{tpu_custom_call.1} parent=1 // pred_check
      _
    $region23: #{tpu_custom_call.1} parent=1 // pred_check_branch
      %90 = sbr.rel (0) target = $region25
    $region24: #{tpu_custom_call.1} parent=1 // pred_region
      %s92 = ssub.s32 32, 32
      %93 = vsyncadd [#allocation10], %s92
      %s95 = sshll.u32 [#allocation11], 4
      %s96 = int_to_ptr.vmem [resolvable:$true] %s95
      %98 = dma.hbm_to_vmem [thread:$0]  %s5, 32, %s96, [#allocation10]
    $region25: #{tpu_custom_call.1} parent=1 // pred_fallthru
      _
    // Predicated region
    $region26: #{tpu_custom_call.1} parent=1 // pred_check
      _
    $region27: #{tpu_custom_call.1} parent=1 // pred_check_branch
      %100 = sbr.rel (0) target = $region29
    $region28: #{tpu_custom_call.1} parent=1 // pred_region
      %s102 = ssub.s32 32, 32
      %103 = vsyncadd [#allocation13], %s102
      %s105 = sshll.u32 [#allocation12], 4
      %s106 = int_to_ptr.vmem [resolvable:$true] %s105
      %108 = dma.hbm_to_vmem [thread:$0]  %s6, 32, %s106, [#allocation13]
    $region29: #{tpu_custom_call.1} parent=1 // pred_fallthru
      _
    // Predicated region
    $region30: #{tpu_custom_call.1} parent=1 // pred_check
      _
    $region31: #{tpu_custom_call.1} parent=1 // pred_check_branch
      %110 = sbr.rel (0) target = $region33
    $region32: #{tpu_custom_call.1} parent=1 // pred_region
      _
    $region33: #{tpu_custom_call.1} parent=1 // pred_fallthru
      _
    // Predicated region
    $region34: #{tpu_custom_call.1} parent=1 // pred_check
      _
    $region35: #{tpu_custom_call.1} parent=1 // pred_check_branch
      %112 = sbr.rel (0) target = $region37
    $region36: #{tpu_custom_call.1} parent=1 // pred_region
      _
    $region37: #{tpu_custom_call.1} parent=1 // pred_fallthru
      _
    // Predicated region
    $region38: #{tpu_custom_call.1} parent=1 // pred_check
      _
    $region39: #{tpu_custom_call.1} parent=1 // pred_check_branch
      %114 = sbr.rel (0) target = $region41
    $region40: #{tpu_custom_call.1} parent=1 // pred_region
      %s116 = ssub.s32 128, 128
      %117 = vsyncadd [#allocation13], %s116
      %s119 = sshll.u32 [#allocation14], 4
      %s120 = int_to_ptr.vmem [resolvable:$true] %s119
      %122 = dma.hbm_to_vmem [thread:$0]  %s9, 128, %s120, [#allocation13]
    $region41: #{tpu_custom_call.1} parent=1 // pred_fallthru
      _
    // Predicated region
    $region42: #{tpu_custom_call.1} parent=1 // pred_check
      _
    $region43: #{tpu_custom_call.1} parent=1 // pred_check_branch
      %124 = sbr.rel (0) target = $region45
    $region44: #{tpu_custom_call.1} parent=1 // pred_region
      %s126 = ssub.s32 16, 16
      %127 = vsyncadd [#allocation16], %s126
      %s129 = sshll.u32 [#allocation15], 4
      %s130 = int_to_ptr.vmem [resolvable:$true] %s129
      %132 = dma.hbm_to_vmem [thread:$0]  %s10, 16, %s130, [#allocation16]
    $region45: #{tpu_custom_call.1} parent=1 // pred_fallthru
      _
    // Predicated region
    $region46: #{tpu_custom_call.1} parent=1 // pred_check
      _
    $region47: #{tpu_custom_call.1} parent=1 // pred_check_branch
      %134 = sbr.rel (0) target = $region49
    $region48: #{tpu_custom_call.1} parent=1 // pred_region
      %s136 = ssub.s32 128, 128
      %137 = vsyncadd [#allocation16], %s136
      %s139 = sshll.u32 [#allocation17], 4
      %s140 = int_to_ptr.vmem [resolvable:$true] %s139
      %142 = dma.hbm_to_vmem [thread:$0]  %s11, 128, %s140, [#allocation16]
    $region49: #{tpu_custom_call.1} parent=1 // pred_fallthru
      _
    // Predicated region
    $region50: #{tpu_custom_call.1} parent=1 // pred_check
      _
    $region51: #{tpu_custom_call.1} parent=1 // pred_check_branch
      %144 = sbr.rel (0) target = $region53
    $region52: #{tpu_custom_call.1} parent=1 // pred_region
      %s146 = ssub.s32 16, 16
      %147 = vsyncadd [#allocation19], %s146
      %s149 = sshll.u32 [#allocation18], 4
      %s150 = int_to_ptr.vmem [resolvable:$true] %s149
      %152 = dma.hbm_to_vmem [thread:$0]  %s12, 16, %s150, [#allocation19]
    $region53: #{tpu_custom_call.1} parent=1 // pred_fallthru
      _
    // Predicated region
    $region54: #{tpu_custom_call.1} parent=1 // pred_check
      _
    $region55: #{tpu_custom_call.1} parent=1 // pred_check_branch
      %154 = sbr.rel (0) target = $region57
    $region56: #{tpu_custom_call.1} parent=1 // pred_region
      %s156 = ssub.s32 64, 64
      %157 = vsyncadd [#allocation19], %s156
      %s159 = sshll.u32 [#allocation20], 4
      %s160 = int_to_ptr.vmem [resolvable:$true] %s159
      %162 = dma.hbm_to_vmem [thread:$0]  %s13, 64, %s160, [#allocation19]
    $region57: #{tpu_custom_call.1} parent=1 // pred_fallthru
      _
    // Predicated region
    $region58: #{tpu_custom_call.1} parent=1 // pred_check
      _
    $region59: #{tpu_custom_call.1} parent=1 // pred_check_branch
      %164 = sbr.rel (0) target = $region61
    $region60: #{tpu_custom_call.1} parent=1 // pred_region
      %s166 = ssub.s32 16, 16
      %167 = vsyncadd [#allocation22], %s166
      %s169 = sshll.u32 [#allocation21], 4
      %s170 = int_to_ptr.vmem [resolvable:$true] %s169
      %172 = dma.hbm_to_vmem [thread:$0]  %s14, 16, %s170, [#allocation22]
    $region61: #{tpu_custom_call.1} parent=1 // pred_fallthru
      _
    // Predicated region
    $region62: #{tpu_custom_call.1} parent=1 // pred_check
      _
    $region63: #{tpu_custom_call.1} parent=1 // pred_check_branch
      %174 = sbr.rel (0) target = $region65
    $region64: #{tpu_custom_call.1} parent=1 // pred_region
      %s176 = ssub.s32 128, 128
      %177 = vsyncadd [#allocation22], %s176
      %s179 = sshll.u32 [#allocation23], 4
      %s180 = int_to_ptr.vmem [resolvable:$true] %s179
      %182 = dma.hbm_to_vmem [thread:$0]  %s15, 128, %s180, [#allocation22]
    $region65: #{tpu_custom_call.1} parent=1 // pred_fallthru
      _
    // Predicated region
    $region66: #{tpu_custom_call.1} parent=1 // pred_check
      _
    $region67: #{tpu_custom_call.1} parent=1 // pred_check_branch
      %184 = sbr.rel (0) target = $region69
    $region68: #{tpu_custom_call.1} parent=1 // pred_region
      %s186 = ssub.s32 16, 16
      %187 = vsyncadd [#allocation25], %s186
      %s189 = sshll.u32 [#allocation24], 4
      %s190 = int_to_ptr.vmem [resolvable:$true] %s189
      %192 = dma.hbm_to_vmem [thread:$0]  %s16, 16, %s190, [#allocation25]
    $region69: #{tpu_custom_call.1} parent=1 // pred_fallthru
      _
    // Predicated region
    $region70: #{tpu_custom_call.1} parent=1 // pred_check
      _
    $region71: #{tpu_custom_call.1} parent=1 // pred_check_branch
      %194 = sbr.rel (0) target = $region73
    $region72: #{tpu_custom_call.1} parent=1 // pred_region
      %s196 = ssub.s32 256, 256
      %197 = vsyncadd [#allocation25], %s196
      %s198 = sshll.u32 [#allocation26], 4
      %s199 = int_to_ptr.vmem [resolvable:$true] %s198
      %204 = dma.hbm_to_vmem [thread:$0]  %s17, 256, %s199, [#allocation25], 128, 128, 8
    $region73: #{tpu_custom_call.1} parent=1 // pred_fallthru
      _
    // Predicated region
    $region74: #{tpu_custom_call.1} parent=1 // pred_check
      _
    $region75: #{tpu_custom_call.1} parent=1 // pred_check_branch
      %206 = sbr.rel (0) target = $region77
    $region76: #{tpu_custom_call.1} parent=1 // pred_region
      %s208 = ssub.s32 16, 16
      %209 = vsyncadd [#allocation28], %s208
      %s211 = sshll.u32 [#allocation27], 4
      %s212 = int_to_ptr.vmem [resolvable:$true] %s211
      %214 = dma.hbm_to_vmem [thread:$0]  %s18, 16, %s212, [#allocation28]
    $region77: #{tpu_custom_call.1} parent=1 // pred_fallthru
      _
    // Predicated region
    $region78: #{tpu_custom_call.1} parent=1 // pred_check
      _
    $region79: #{tpu_custom_call.1} parent=1 // pred_check_branch
      %216 = sbr.rel (0) target = $region81
    $region80: #{tpu_custom_call.1} parent=1 // pred_region
      _
    $region81: #{tpu_custom_call.1} parent=1 // pred_fallthru
      _
    // Predicated region
    $region82: #{tpu_custom_call.1} parent=1 // pred_check
      _
    $region83: #{tpu_custom_call.1} parent=1 // pred_check_branch
      %218 = sbr.rel (0) target = $region85
    $region84: #{tpu_custom_call.1} parent=1 // pred_region
      %s220 = ssub.s32 16, 16
      %221 = vsyncadd [#allocation28], %s220
      %s223 = sshll.u32 [#allocation29], 4
      %s224 = int_to_ptr.vmem [resolvable:$true] %s223
      %226 = dma.hbm_to_vmem [thread:$0]  %s20, 16, %s224, [#allocation28]
    $region85: #{tpu_custom_call.1} parent=1 // pred_fallthru
      _
    // Predicated region
    $region86: #{tpu_custom_call.1} parent=1 // pred_check
      _
    $region87: #{tpu_custom_call.1} parent=1 // pred_check_branch
      %228 = sbr.rel (0) target = $region89
    $region88: #{tpu_custom_call.1} parent=1 // pred_region
      %s230 = ssub.s32 1024, 1024
      %231 = vsyncadd [#allocation31], %s230
      %s232 = sshll.u32 [#allocation30], 4
      %s233 = int_to_ptr.vmem [resolvable:$true] %s232
      %238 = dma.hbm_to_vmem [thread:$0]  %s21, 1024, %s233, [#allocation31], 128, 128, 8
    $region89: #{tpu_custom_call.1} parent=1 // pred_fallthru
      _
    // Predicated region
    $region90: #{tpu_custom_call.1} parent=1 // pred_check
      _
    $region91: #{tpu_custom_call.1} parent=1 // pred_check_branch
      %240 = sbr.rel (0) target = $region93
    $region92: #{tpu_custom_call.1} parent=1 // pred_region
      %s242 = ssub.s32 128, 128
      %243 = vsyncadd [#allocation31], %s242
      %s245 = sshll.u32 [#allocation32], 4
      %s246 = int_to_ptr.vmem [resolvable:$true] %s245
      %248 = dma.hbm_to_vmem [thread:$0]  %s22, 128, %s246, [#allocation31]
    $region93: #{tpu_custom_call.1} parent=1 // pred_fallthru
      _
    // Predicated region
    $region94: #{tpu_custom_call.1} parent=1 // pred_check
      _
    $region95: #{tpu_custom_call.1} parent=1 // pred_check_branch
      %250 = sbr.rel (0) target = $region97
    $region96: #{tpu_custom_call.1} parent=1 // pred_region
      %s252 = ssub.s32 16, 16
      %253 = vsyncadd [#allocation34], %s252
      %s255 = sshll.u32 [#allocation33], 4
      %s256 = int_to_ptr.vmem [resolvable:$true] %s255
      %258 = dma.hbm_to_vmem [thread:$0]  %s23, 16, %s256, [#allocation34]
    $region97: #{tpu_custom_call.1} parent=1 // pred_fallthru
      _
    // Predicated region
    $region98: #{tpu_custom_call.1} parent=1 // pred_check
      _
    $region99: #{tpu_custom_call.1} parent=1 // pred_check_branch
      %260 = sbr.rel (0) target = $region101
    $region100: #{tpu_custom_call.1} parent=1 // pred_region
      _
    $region101: #{tpu_custom_call.1} parent=1 // pred_fallthru
      _
    // Predicated region
    $region102: #{tpu_custom_call.1} parent=1 // pred_check
      _
    $region103: #{tpu_custom_call.1} parent=1 // pred_check_branch
      %262 = sbr.rel (0) target = $region105
    $region104: #{tpu_custom_call.1} parent=1 // pred_region
      %s264 = ssub.s32 16, 16
      %265 = vsyncadd [#allocation34], %s264
      %s267 = sshll.u32 [#allocation35], 4
      %s268 = int_to_ptr.vmem [resolvable:$true] %s267
      %270 = dma.hbm_to_vmem [thread:$0]  %s25, 16, %s268, [#allocation34]
    $region105: #{tpu_custom_call.1} parent=1 // pred_fallthru
      _
    // Predicated region
    $region106: #{tpu_custom_call.1} parent=1 // pred_check
      _
    $region107: #{tpu_custom_call.1} parent=1 // pred_check_branch
      %272 = sbr.rel (0) target = $region109
    $region108: #{tpu_custom_call.1} parent=1 // pred_region
      _
    $region109: #{tpu_custom_call.1} parent=1 // pred_fallthru
      _
    // Predicated region
    $region110: #{tpu_custom_call.1} parent=1 // pred_check
      _
    $region111: #{tpu_custom_call.1} parent=1 // pred_check_branch
      %274 = sbr.rel (0) target = $region113
    $region112: #{tpu_custom_call.1} parent=1 // pred_region
      _
    $region113: #{tpu_custom_call.1} parent=1 // pred_fallthru
      _
    // Predicated region
    $region114: #{tpu_custom_call.1} parent=1 // pred_check
      _
    $region115: #{tpu_custom_call.1} parent=1 // pred_check_branch
      %276 = sbr.rel (0) target = $region117
    $region116: #{tpu_custom_call.1} parent=1 // pred_region
      %277 = dma.done [#allocation4], 64
    $region117: #{tpu_custom_call.1} parent=1 // pred_fallthru
      _
    // Predicated region
    $region118: #{tpu_custom_call.1} parent=1 // pred_check
      _
    $region119: #{tpu_custom_call.1} parent=1 // pred_check_branch
      %279 = sbr.rel (0) target = $region121
    $region120: #{tpu_custom_call.1} parent=1 // pred_region
      %280 = dma.done [#allocation7], 32
    $region121: #{tpu_custom_call.1} parent=1 // pred_fallthru
      _
    // Predicated region
    $region122: #{tpu_custom_call.1} parent=1 // pred_check
      _
    $region123: #{tpu_custom_call.1} parent=1 // pred_check_branch
      %282 = sbr.rel (0) target = $region125
    $region124: #{tpu_custom_call.1} parent=1 // pred_region
      %283 = dma.done [#allocation7], 32
    $region125: #{tpu_custom_call.1} parent=1 // pred_fallthru
      _
    // Predicated region
    $region126: #{tpu_custom_call.1} parent=1 // pred_check
      _
    $region127: #{tpu_custom_call.1} parent=1 // pred_check_branch
      %285 = sbr.rel (0) target = $region129
    $region128: #{tpu_custom_call.1} parent=1 // pred_region
      %286 = dma.done [#allocation10], 256
    $region129: #{tpu_custom_call.1} parent=1 // pred_fallthru
      _
    // Predicated region
    $region130: #{tpu_custom_call.1} parent=1 // pred_check
      _
    $region131: #{tpu_custom_call.1} parent=1 // pred_check_branch
      %288 = sbr.rel (0) target = $region133
    $region132: #{tpu_custom_call.1} parent=1 // pred_region
      %289 = dma.done [#allocation10], 32
    $region133: #{tpu_custom_call.1} parent=1 // pred_fallthru
      _
    // Predicated region
    $region134: #{tpu_custom_call.1} parent=1 // pred_check
      _
    $region135: #{tpu_custom_call.1} parent=1 // pred_check_branch
      %291 = sbr.rel (0) target = $region137
    $region136: #{tpu_custom_call.1} parent=1 // pred_region
      %292 = dma.done [#allocation13], 32
    $region137: #{tpu_custom_call.1} parent=1 // pred_fallthru
      _
    // Predicated region
    $region138: #{tpu_custom_call.1} parent=1 // pred_check
      _
    $region139: #{tpu_custom_call.1} parent=1 // pred_check_branch
      %294 = sbr.rel (0) target = $region141
    $region140: #{tpu_custom_call.1} parent=1 // pred_region
      %295 = dma.done [#allocation13], 128
    $region141: #{tpu_custom_call.1} parent=1 // pred_fallthru
      _
    // Predicated region
    $region142: #{tpu_custom_call.1} parent=1 // pred_check
      _
    $region143: #{tpu_custom_call.1} parent=1 // pred_check_branch
      %297 = sbr.rel (0) target = $region145
    $region144: #{tpu_custom_call.1} parent=1 // pred_region
      %298 = dma.done [#allocation16], 16
    $region145: #{tpu_custom_call.1} parent=1 // pred_fallthru
      _
    // Predicated region
    $region146: #{tpu_custom_call.1} parent=1 // pred_check
      _
    $region147: #{tpu_custom_call.1} parent=1 // pred_check_branch
      %300 = sbr.rel (0) target = $region149
    $region148: #{tpu_custom_call.1} parent=1 // pred_region
      %301 = dma.done [#allocation16], 128
    $region149: #{tpu_custom_call.1} parent=1 // pred_fallthru
      _
    // Predicated region
    $region150: #{tpu_custom_call.1} parent=1 // pred_check
      _
    $region151: #{tpu_custom_call.1} parent=1 // pred_check_branch
      %303 = sbr.rel (0) target = $region153
    $region152: #{tpu_custom_call.1} parent=1 // pred_region
      %304 = dma.done [#allocation19], 16
    $region153: #{tpu_custom_call.1} parent=1 // pred_fallthru
      _
    // Predicated region
    $region154: #{tpu_custom_call.1} parent=1 // pred_check
      _
    $region155: #{tpu_custom_call.1} parent=1 // pred_check_branch
      %306 = sbr.rel (0) target = $region157
    $region156: #{tpu_custom_call.1} parent=1 // pred_region
      %307 = dma.done [#allocation19], 64
    $region157: #{tpu_custom_call.1} parent=1 // pred_fallthru
      _
    // Predicated region
    $region158: #{tpu_custom_call.1} parent=1 // pred_check
      _
    $region159: #{tpu_custom_call.1} parent=1 // pred_check_branch
      %309 = sbr.rel (0) target = $region161
    $region160: #{tpu_custom_call.1} parent=1 // pred_region
      %310 = dma.done [#allocation22], 16
    $region161: #{tpu_custom_call.1} parent=1 // pred_fallthru
      _
    // Predicated region
    $region162: #{tpu_custom_call.1} parent=1 // pred_check
      _
    $region163: #{tpu_custom_call.1} parent=1 // pred_check_branch
      %312 = sbr.rel (0) target = $region165
    $region164: #{tpu_custom_call.1} parent=1 // pred_region
      %313 = dma.done [#allocation22], 128
    $region165: #{tpu_custom_call.1} parent=1 // pred_fallthru
      _
    // Predicated region
    $region166: #{tpu_custom_call.1} parent=1 // pred_check
      _
    $region167: #{tpu_custom_call.1} parent=1 // pred_check_branch
      %315 = sbr.rel (0) target = $region169
    $region168: #{tpu_custom_call.1} parent=1 // pred_region
      %316 = dma.done [#allocation25], 16
    $region169: #{tpu_custom_call.1} parent=1 // pred_fallthru
      _
    // Predicated region
    $region170: #{tpu_custom_call.1} parent=1 // pred_check
      _
    $region171: #{tpu_custom_call.1} parent=1 // pred_check_branch
      %318 = sbr.rel (0) target = $region173
    $region172: #{tpu_custom_call.1} parent=1 // pred_region
      %319 = dma.done [#allocation25], 256
    $region173: #{tpu_custom_call.1} parent=1 // pred_fallthru
      _
    // Predicated region
    $region174: #{tpu_custom_call.1} parent=1 // pred_check
      _
    $region175: #{tpu_custom_call.1} parent=1 // pred_check_branch
      %321 = sbr.rel (0) target = $region177
    $region176: #{tpu_custom_call.1} parent=1 // pred_region
      %322 = dma.done [#allocation28], 16
    $region177: #{tpu_custom_call.1} parent=1 // pred_fallthru
      _
    // Predicated region
    $region178: #{tpu_custom_call.1} parent=1 // pred_check
      _
    $region179: #{tpu_custom_call.1} parent=1 // pred_check_branch
      %324 = sbr.rel (0) target = $region181
    $region180: #{tpu_custom_call.1} parent=1 // pred_region
      %325 = dma.done [#allocation28], 16
    $region181: #{tpu_custom_call.1} parent=1 // pred_fallthru
      _
    // Predicated region
    $region182: #{tpu_custom_call.1} parent=1 // pred_check
      _
    $region183: #{tpu_custom_call.1} parent=1 // pred_check_branch
      %327 = sbr.rel (0) target = $region185
    $region184: #{tpu_custom_call.1} parent=1 // pred_region
      %328 = dma.done [#allocation31], 1024
    $region185: #{tpu_custom_call.1} parent=1 // pred_fallthru
      _
    // Predicated region
    $region186: #{tpu_custom_call.1} parent=1 // pred_check
      _
    $region187: #{tpu_custom_call.1} parent=1 // pred_check_branch
      %330 = sbr.rel (0) target = $region189
    $region188: #{tpu_custom_call.1} parent=1 // pred_region
      %331 = dma.done [#allocation31], 128
    $region189: #{tpu_custom_call.1} parent=1 // pred_fallthru
      _
    // Predicated region
    $region190: #{tpu_custom_call.1} parent=1 // pred_check
      _
    $region191: #{tpu_custom_call.1} parent=1 // pred_check_branch
      %333 = sbr.rel (0) target = $region193
    $region192: #{tpu_custom_call.1} parent=1 // pred_region
      %334 = dma.done [#allocation34], 16
    $region193: #{tpu_custom_call.1} parent=1 // pred_fallthru
      _
    // Predicated region
    $region194: #{tpu_custom_call.1} parent=1 // pred_check
      _
    $region195: #{tpu_custom_call.1} parent=1 // pred_check_branch
      %336 = sbr.rel (0) target = $region197
    $region196: #{tpu_custom_call.1} parent=1 // pred_region
      %337 = dma.done [#allocation34], 16
    $region197: #{tpu_custom_call.1} parent=1 // pred_fallthru
      _
    %v338 = vld [vmem:[%s0] sm:$0xf]
    %v339 = vld [vmem:[%s7] sm:$0x1f]
    %v340 = vld [vmem:[%s8] sm:$0x1]
    %v342 = vlaneseq
    %v343 = vshrl.u32 %v342, 7
    %v344 = vsub.s32 0, %v343
    %v345 = vrot.slane %v340, %v344
    %vm347 = vcmask 39936
    %v349 = vsel %vm347, %v338, 0
    %vm351 = vcmask 1044480
    %v353 = vsel %vm351, %v339, 0
    %355 = vmatprep.subr.mxu0 0.0
    %356 = vmatpush1.msra.mxu0 0.0
    %357 = vmatprep.subr.mxu0 0.0
    %358 = vmatpush1.msra.mxu0 0.0
    %359 = vmatprep.subr.mxu0 0.0
    %360 = vmatpush1.msra.mxu0 0.0
    %361 = vmatprep.subr.mxu0 0.0
    %362 = vmatpush1.msra.mxu0 0.0
    %363 = vmatprep.subr.mxu0 0.0
    %364 = vmatpush1.msra.mxu0 0.0
    %365 = vmatprep.subr.mxu0 0.0
    %366 = vmatpush1.msra.mxu0 0.0
    %367 = vmatprep.subr.mxu0 0.0
    %368 = vmatpush1.msra.mxu0 0.0
    %369 = vmatprep.subr.mxu0 0.0
    %370 = vmatpush1.msra.mxu0 0.0
    %371 = vmatprep.subr.mxu0 0.0
    %372 = vmatpush1.msra.mxu0 0.0
    %373 = vmatprep.subr.mxu0 0.0
    %374 = vmatpush1.msra.mxu0 0.0
    %375 = vmatprep.subr.mxu0 0.0
    %376 = vmatpush1.msra.mxu0 0.0
    %377 = vmatprep.subr.mxu0 0.0
    %378 = vmatpush1.msra.mxu0 0.0
    %379 = vmatprep.subr.mxu0 0.0
    %380 = vmatpush1.msra.mxu0 0.0
    %381 = vmatprep.subr.mxu0 0.0
    %382 = vmatpush1.msra.mxu0 0.0
    %383 = vmatprep.subr.mxu0 0.0
    %384 = vmatpush1.msra.mxu0 0.0
    %385 = vmatprep.subr.mxu0 0.0
    %386 = vmatpush1.msra.mxu0 %v353
    %387 = vmatprep.subr.mxu0 0.0
    %388 = vmatpush2.msra.mxu0 0.0
    %389 = vmatprep.subr.mxu0 0.0
    %390 = vmatpush2.msra.mxu0 0.0
    %391 = vmatprep.subr.mxu0 0.0
    %392 = vmatpush2.msra.mxu0 0.0
    %393 = vmatprep.subr.mxu0 0.0
    %394 = vmatpush2.msra.mxu0 0.0
    %395 = vmatprep.subr.mxu0 0.0
    %396 = vmatpush2.msra.mxu0 0.0
    %397 = vmatprep.subr.mxu0 0.0
    %398 = vmatpush2.msra.mxu0 0.0
    %399 = vmatprep.subr.mxu0 0.0
    %400 = vmatpush2.msra.mxu0 0.0
    %401 = vmatprep.subr.mxu0 0.0
    %402 = vmatpush2.msra.mxu0 0.0
    %403 = vmatprep.subr.mxu0 0.0
    %404 = vmatpush2.msra.mxu0 0.0
    %405 = vmatprep.subr.mxu0 0.0
    %406 = vmatpush2.msra.mxu0 0.0
    %407 = vmatprep.subr.mxu0 0.0
    %408 = vmatpush2.msra.mxu0 0.0
    %409 = vmatprep.subr.mxu0 0.0
    %410 = vmatpush2.msra.mxu0 0.0
    %411 = vmatprep.subr.mxu0 0.0
    %412 = vmatpush2.msra.mxu0 0.0
    %413 = vmatprep.subr.mxu0 0.0
    %414 = vmatpush2.msra.mxu0 0.0
    %415 = vmatprep.subr.mxu0 0.0
    %416 = vmatpush2.msra.mxu0 0.0
    %417 = vmatprep.subr.mxu0 0.0
    %418 = vmatpush2.msra.mxu0 0.0
    %419 = vmatprep.mubr.f32.mxu0 0.0
    %420 = vmatmul.mubr.f32.gmra.mxu0 %v349
    %v421 = vpop.f32.mrf.mxu0
    %v422 = vadd.f32 %v345, %v421
    %v423 = vpop.f32.mrf.mxu0
    %424 = vdwg.mxu0
    %vm425 = vcmask 60416
    %426 = vst.msk [vmem:[#allocation2] sm:$0xf] %vm425, %v422
    %v427 = vld [vmem:[#allocation3] sm:$0xf]
    %v428 = vld [vmem:[#allocation14] sm:$0x3f]
    %v429 = vld [vmem:[#allocation15] sm:$0x1]
    %v431 = vlaneseq
    %v432 = vshrl.u32 %v431, 7
    %v433 = vsub.s32 0, %v432
    %v434 = vrot.slane %v429, %v433
    %vm436 = vcmask 48128
    %v438 = vsel %vm436, %v427, 0
    %vm440 = vcmask 1045504
    %v442 = vsel %vm440, %v428, 0
    %444 = vmatprep.subr.mxu0 0.0
    %445 = vmatpush1.msra.mxu0 0.0
    %446 = vmatprep.subr.mxu0 0.0
    %447 = vmatpush1.msra.mxu0 0.0
    %448 = vmatprep.subr.mxu0 0.0
    %449 = vmatpush1.msra.mxu0 0.0
    %450 = vmatprep.subr.mxu0 0.0
    %451 = vmatpush1.msra.mxu0 0.0
    %452 = vmatprep.subr.mxu0 0.0
    %453 = vmatpush1.msra.mxu0 0.0
    %454 = vmatprep.subr.mxu0 0.0
    %455 = vmatpush1.msra.mxu0 0.0
    %456 = vmatprep.subr.mxu0 0.0
    %457 = vmatpush1.msra.mxu0 0.0
    %458 = vmatprep.subr.mxu0 0.0
    %459 = vmatpush1.msra.mxu0 0.0
    %460 = vmatprep.subr.mxu0 0.0
    %461 = vmatpush1.msra.mxu0 0.0
    %462 = vmatprep.subr.mxu0 0.0
    %463 = vmatpush1.msra.mxu0 0.0
    %464 = vmatprep.subr.mxu0 0.0
    %465 = vmatpush1.msra.mxu0 0.0
    %466 = vmatprep.subr.mxu0 0.0
    %467 = vmatpush1.msra.mxu0 0.0
    %468 = vmatprep.subr.mxu0 0.0
    %469 = vmatpush1.msra.mxu0 0.0
    %470 = vmatprep.subr.mxu0 0.0
    %471 = vmatpush1.msra.mxu0 0.0
    %472 = vmatprep.subr.mxu0 0.0
    %473 = vmatpush1.msra.mxu0 0.0
    %474 = vmatprep.subr.mxu0 0.0
    %475 = vmatpush1.msra.mxu0 %v442
    %476 = vmatprep.subr.mxu0 0.0
    %477 = vmatpush2.msra.mxu0 0.0
    %478 = vmatprep.subr.mxu0 0.0
    %479 = vmatpush2.msra.mxu0 0.0
    %480 = vmatprep.subr.mxu0 0.0
    %481 = vmatpush2.msra.mxu0 0.0
    %482 = vmatprep.subr.mxu0 0.0
    %483 = vmatpush2.msra.mxu0 0.0
    %484 = vmatprep.subr.mxu0 0.0
    %485 = vmatpush2.msra.mxu0 0.0
    %486 = vmatprep.subr.mxu0 0.0
    %487 = vmatpush2.msra.mxu0 0.0
    %488 = vmatprep.subr.mxu0 0.0
    %489 = vmatpush2.msra.mxu0 0.0
    %490 = vmatprep.subr.mxu0 0.0
    %491 = vmatpush2.msra.mxu0 0.0
    %492 = vmatprep.subr.mxu0 0.0
    %493 = vmatpush2.msra.mxu0 0.0
    %494 = vmatprep.subr.mxu0 0.0
    %495 = vmatpush2.msra.mxu0 0.0
    %496 = vmatprep.subr.mxu0 0.0
    %497 = vmatpush2.msra.mxu0 0.0
    %498 = vmatprep.subr.mxu0 0.0
    %499 = vmatpush2.msra.mxu0 0.0
    %500 = vmatprep.subr.mxu0 0.0
    %501 = vmatpush2.msra.mxu0 0.0
    %502 = vmatprep.subr.mxu0 0.0
    %503 = vmatpush2.msra.mxu0 0.0
    %504 = vmatprep.subr.mxu0 0.0
    %505 = vmatpush2.msra.mxu0 0.0
    %506 = vmatprep.subr.mxu0 0.0
    %507 = vmatpush2.msra.mxu0 0.0
    %508 = vmatprep.mubr.f32.mxu0 0.0
    %509 = vmatmul.mubr.f32.gmra.mxu0 %v438
    %v510 = vpop.f32.mrf.mxu0
    %v511 = vadd.f32 %v434, %v510
    %v512 = vpop.f32.mrf.mxu0
    %513 = vdwg.mxu0
    %514 = vst.msk [vmem:[#allocation2 + $0x4] sm:$0xf] %vm425, %v511
    %v515 = vld [vmem:[#allocation6] sm:$0x3]
    %v516 = vld [vmem:[#allocation17] sm:$0x7f]
    %v517 = vld [vmem:[#allocation18] sm:$0x1]
    %v519 = vlaneseq
    %v520 = vshrl.u32 %v519, 7
    %v521 = vsub.s32 0, %v520
    %v522 = vrot.slane %v517, %v521
    %vm524 = vcmask 56320
    %v526 = vsel %vm524, %v515, 0
    %vm528 = vcmask 1046528
    %v530 = vsel %vm528, %v516, 0
    %532 = vmatprep.subr.mxu0 0.0
    %533 = vmatpush1.msra.mxu0 0.0
    %534 = vmatprep.subr.mxu0 0.0
    %535 = vmatpush1.msra.mxu0 0.0
    %536 = vmatprep.subr.mxu0 0.0
    %537 = vmatpush1.msra.mxu0 0.0
    %538 = vmatprep.subr.mxu0 0.0
    %539 = vmatpush1.msra.mxu0 0.0
    %540 = vmatprep.subr.mxu0 0.0
    %541 = vmatpush1.msra.mxu0 0.0
    %542 = vmatprep.subr.mxu0 0.0
    %543 = vmatpush1.msra.mxu0 0.0
    %544 = vmatprep.subr.mxu0 0.0
    %545 = vmatpush1.msra.mxu0 0.0
    %546 = vmatprep.subr.mxu0 0.0
    %547 = vmatpush1.msra.mxu0 0.0
    %548 = vmatprep.subr.mxu0 0.0
    %549 = vmatpush1.msra.mxu0 0.0
    %550 = vmatprep.subr.mxu0 0.0
    %551 = vmatpush1.msra.mxu0 0.0
    %552 = vmatprep.subr.mxu0 0.0
    %553 = vmatpush1.msra.mxu0 0.0
    %554 = vmatprep.subr.mxu0 0.0
    %555 = vmatpush1.msra.mxu0 0.0
    %556 = vmatprep.subr.mxu0 0.0
    %557 = vmatpush1.msra.mxu0 0.0
    %558 = vmatprep.subr.mxu0 0.0
    %559 = vmatpush1.msra.mxu0 0.0
    %560 = vmatprep.subr.mxu0 0.0
    %561 = vmatpush1.msra.mxu0 0.0
    %562 = vmatprep.subr.mxu0 0.0
    %563 = vmatpush1.msra.mxu0 %v530
    %564 = vmatprep.subr.mxu0 0.0
    %565 = vmatpush2.msra.mxu0 0.0
    %566 = vmatprep.subr.mxu0 0.0
    %567 = vmatpush2.msra.mxu0 0.0
    %568 = vmatprep.subr.mxu0 0.0
    %569 = vmatpush2.msra.mxu0 0.0
    %570 = vmatprep.subr.mxu0 0.0
    %571 = vmatpush2.msra.mxu0 0.0
    %572 = vmatprep.subr.mxu0 0.0
    %573 = vmatpush2.msra.mxu0 0.0
    %574 = vmatprep.subr.mxu0 0.0
    %575 = vmatpush2.msra.mxu0 0.0
    %576 = vmatprep.subr.mxu0 0.0
    %577 = vmatpush2.msra.mxu0 0.0
    %578 = vmatprep.subr.mxu0 0.0
    %579 = vmatpush2.msra.mxu0 0.0
    %580 = vmatprep.subr.mxu0 0.0
    %581 = vmatpush2.msra.mxu0 0.0
    %582 = vmatprep.subr.mxu0 0.0
    %583 = vmatpush2.msra.mxu0 0.0
    %584 = vmatprep.subr.mxu0 0.0
    %585 = vmatpush2.msra.mxu0 0.0
    %586 = vmatprep.subr.mxu0 0.0
    %587 = vmatpush2.msra.mxu0 0.0
    %588 = vmatprep.subr.mxu0 0.0
    %589 = vmatpush2.msra.mxu0 0.0
    %590 = vmatprep.subr.mxu0 0.0
    %591 = vmatpush2.msra.mxu0 0.0
    %592 = vmatprep.subr.mxu0 0.0
    %593 = vmatpush2.msra.mxu0 0.0
    %594 = vmatprep.subr.mxu0 0.0
    %595 = vmatpush2.msra.mxu0 0.0
    %596 = vmatprep.mubr.f32.mxu0 0.0
    %597 = vmatmul.mubr.f32.gmra.mxu0 %v526
    %v598 = vpop.f32.mrf.mxu0
    %v599 = vadd.f32 %v522, %v598
    %v600 = vpop.f32.mrf.mxu0
    %601 = vdwg.mxu0
    %vm602 = vcmask 58368
    %603 = vst.msk [vmem:[#allocation2 + $0x8] sm:$0x3] %vm602, %v599
    %v604 = vld [vmem:[#allocation8] sm:$0x3]
    %v605 = vld [vmem:[#allocation20] sm:$0xf]
    %v606 = vld [vmem:[#allocation21] sm:$0x1]
    %v608 = vlaneseq
    %v609 = vshrl.u32 %v608, 7
    %v610 = vsub.s32 0, %v609
    %v611 = vrot.slane %v606, %v610
    %vm613 = vcmask 31744
    %v615 = vsel %vm613, %v604, 0
    %vm617 = vcmask 1043456
    %v619 = vsel %vm617, %v605, 0
    %621 = vmatprep.subr.mxu0 0.0
    %622 = vmatpush1.msra.mxu0 0.0
    %623 = vmatprep.subr.mxu0 0.0
    %624 = vmatpush1.msra.mxu0 0.0
    %625 = vmatprep.subr.mxu0 0.0
    %626 = vmatpush1.msra.mxu0 0.0
    %627 = vmatprep.subr.mxu0 0.0
    %628 = vmatpush1.msra.mxu0 0.0
    %629 = vmatprep.subr.mxu0 0.0
    %630 = vmatpush1.msra.mxu0 0.0
    %631 = vmatprep.subr.mxu0 0.0
    %632 = vmatpush1.msra.mxu0 0.0
    %633 = vmatprep.subr.mxu0 0.0
    %634 = vmatpush1.msra.mxu0 0.0
    %635 = vmatprep.subr.mxu0 0.0
    %636 = vmatpush1.msra.mxu0 0.0
    %637 = vmatprep.subr.mxu0 0.0
    %638 = vmatpush1.msra.mxu0 0.0
    %639 = vmatprep.subr.mxu0 0.0
    %640 = vmatpush1.msra.mxu0 0.0
    %641 = vmatprep.subr.mxu0 0.0
    %642 = vmatpush1.msra.mxu0 0.0
    %643 = vmatprep.subr.mxu0 0.0
    %644 = vmatpush1.msra.mxu0 0.0
    %645 = vmatprep.subr.mxu0 0.0
    %646 = vmatpush1.msra.mxu0 0.0
    %647 = vmatprep.subr.mxu0 0.0
    %648 = vmatpush1.msra.mxu0 0.0
    %649 = vmatprep.subr.mxu0 0.0
    %650 = vmatpush1.msra.mxu0 0.0
    %651 = vmatprep.subr.mxu0 0.0
    %652 = vmatpush1.msra.mxu0 %v619
    %653 = vmatprep.subr.mxu0 0.0
    %654 = vmatpush2.msra.mxu0 0.0
    %655 = vmatprep.subr.mxu0 0.0
    %656 = vmatpush2.msra.mxu0 0.0
    %657 = vmatprep.subr.mxu0 0.0
    %658 = vmatpush2.msra.mxu0 0.0
    %659 = vmatprep.subr.mxu0 0.0
    %660 = vmatpush2.msra.mxu0 0.0
    %661 = vmatprep.subr.mxu0 0.0
    %662 = vmatpush2.msra.mxu0 0.0
    %663 = vmatprep.subr.mxu0 0.0
    %664 = vmatpush2.msra.mxu0 0.0
    %665 = vmatprep.subr.mxu0 0.0
    %666 = vmatpush2.msra.mxu0 0.0
    %667 = vmatprep.subr.mxu0 0.0
    %668 = vmatpush2.msra.mxu0 0.0
    %669 = vmatprep.subr.mxu0 0.0
    %670 = vmatpush2.msra.mxu0 0.0
    %671 = vmatprep.subr.mxu0 0.0
    %672 = vmatpush2.msra.mxu0 0.0
    %673 = vmatprep.subr.mxu0 0.0
    %674 = vmatpush2.msra.mxu0 0.0
    %675 = vmatprep.subr.mxu0 0.0
    %676 = vmatpush2.msra.mxu0 0.0
    %677 = vmatprep.subr.mxu0 0.0
    %678 = vmatpush2.msra.mxu0 0.0
    %679 = vmatprep.subr.mxu0 0.0
    %680 = vmatpush2.msra.mxu0 0.0
    %681 = vmatprep.subr.mxu0 0.0
    %682 = vmatpush2.msra.mxu0 0.0
    %683 = vmatprep.subr.mxu0 0.0
    %684 = vmatpush2.msra.mxu0 0.0
    %685 = vmatprep.mubr.f32.mxu0 0.0
    %686 = vmatmul.mubr.f32.gmra.mxu0 %v615
    %v687 = vpop.f32.mrf.mxu0
    %v688 = vadd.f32 %v611, %v687
    %v689 = vpop.f32.mrf.mxu0
    %690 = vdwg.mxu0
    %691 = vst.msk [vmem:[#allocation2 + $0xa] sm:$0x3] %vm602, %v688
    %v692 = vld [vmem:[#allocation9] sm:$0xff]
    %v693 = vld [vmem:[#allocation9 + $0x8] sm:$0xf]
    %v694 = vld [vmem:[#allocation2] sm:$0xff]
    %v695 = vld [vmem:[#allocation2 + $0x8] sm:$0xf]
    %v696 = vld [vmem:[#allocation23] sm:$0xff]
    %vm697 = vcmask 64512
    %v699 = vsel %vm697, %v694, 0
    %v702 = vsel %vm697, %v695, 0
    %704 = vmatprep.subr.mxu0 0.0
    %705 = vmatpush1.msra.mxu0 0.0
    %706 = vmatprep.subr.mxu0 0.0
    %707 = vmatpush1.msra.mxu0 0.0
    %708 = vmatprep.subr.mxu0 0.0
    %709 = vmatpush1.msra.mxu0 0.0
    %710 = vmatprep.subr.mxu0 0.0
    %711 = vmatpush1.msra.mxu0 0.0
    %712 = vmatprep.subr.mxu0 0.0
    %713 = vmatpush1.msra.mxu0 0.0
    %714 = vmatprep.subr.mxu0 0.0
    %715 = vmatpush1.msra.mxu0 0.0
    %716 = vmatprep.subr.mxu0 0.0
    %717 = vmatpush1.msra.mxu0 0.0
    %718 = vmatprep.subr.mxu0 0.0
    %719 = vmatpush1.msra.mxu0 0.0
    %720 = vmatprep.subr.mxu0 0.0
    %721 = vmatpush1.msra.mxu0 0.0
    %722 = vmatprep.subr.mxu0 0.0
    %723 = vmatpush1.msra.mxu0 0.0
    %724 = vmatprep.subr.mxu0 0.0
    %725 = vmatpush1.msra.mxu0 0.0
    %726 = vmatprep.subr.mxu0 0.0
    %727 = vmatpush1.msra.mxu0 0.0
    %728 = vmatprep.subr.mxu0 0.0
    %729 = vmatpush1.msra.mxu0 0.0
    %730 = vmatprep.subr.mxu0 0.0
    %731 = vmatpush1.msra.mxu0 0.0
    %732 = vmatprep.subr.mxu0 0.0
    %733 = vmatpush1.msra.mxu0 0.0
    %734 = vmatprep.subr.mxu0 0.0
    %735 = vmatpush1.msra.mxu0 %v696
    %736 = vmatprep.subr.mxu0 0.0
    %737 = vmatpush2.msra.mxu0 0.0
    %738 = vmatprep.subr.mxu0 0.0
    %739 = vmatpush2.msra.mxu0 0.0
    %740 = vmatprep.subr.mxu0 0.0
    %741 = vmatpush2.msra.mxu0 0.0
    %742 = vmatprep.subr.mxu0 0.0
    %743 = vmatpush2.msra.mxu0 0.0
    %744 = vmatprep.subr.mxu0 0.0
    %745 = vmatpush2.msra.mxu0 0.0
    %746 = vmatprep.subr.mxu0 0.0
    %747 = vmatpush2.msra.mxu0 0.0
    %748 = vmatprep.subr.mxu0 0.0
    %749 = vmatpush2.msra.mxu0 0.0
    %750 = vmatprep.subr.mxu0 0.0
    %751 = vmatpush2.msra.mxu0 0.0
    %752 = vmatprep.subr.mxu0 0.0
    %753 = vmatpush2.msra.mxu0 0.0
    %754 = vmatprep.subr.mxu0 0.0
    %755 = vmatpush2.msra.mxu0 0.0
    %756 = vmatprep.subr.mxu0 0.0
    %757 = vmatpush2.msra.mxu0 0.0
    %758 = vmatprep.subr.mxu0 0.0
    %759 = vmatpush2.msra.mxu0 0.0
    %760 = vmatprep.subr.mxu0 0.0
    %761 = vmatpush2.msra.mxu0 0.0
    %762 = vmatprep.subr.mxu0 0.0
    %763 = vmatpush2.msra.mxu0 0.0
    %764 = vmatprep.subr.mxu0 0.0
    %765 = vmatpush2.msra.mxu0 0.0
    %766 = vmatprep.subr.mxu0 0.0
    %767 = vmatpush2.msra.mxu0 0.0
    %768 = vmatprep.mubr.f32.mxu0 0.0
    %769 = vmatmul.mubr.f32.gmra.mxu0 %v699
    %v770 = vpop.f32.mrf.mxu0
    %v771 = vadd.f32 0.0, %v770
    %v772 = vpop.f32.mrf.mxu0
    %773 = vmatprep.mubr.f32.mxu0 0.0
    %774 = vmatmul.mubr.f32.gmra.mxu0 %v702
    %v775 = vpop.f32.mrf.mxu0
    %v776 = vadd.f32 0.0, %v775
    %v777 = vpop.f32.mrf.mxu0
    %778 = vdwg.mxu0
    %v779 = vld [vmem:[#allocation24] sm:$0x1]
    %v781 = vlaneseq
    %v782 = vshrl.u32 %v781, 7
    %v783 = vsub.s32 0, %v782
    %v784 = vrot.slane %v779, %v783
    %vm786 = vcmask 97280
    %v788 = vsel %vm786, %v692, 0
    %v791 = vsel %vm786, %v693, 0
    %v794 = vsel %vm617, %v776, 0
    %796 = vmatprep.subr.mxu0 0.0
    %797 = vmatpush1.msra.mxu0 0.0
    %798 = vmatprep.subr.mxu0 0.0
    %799 = vmatpush1.msra.mxu0 0.0
    %800 = vmatprep.subr.mxu0 0.0
    %801 = vmatpush1.msra.mxu0 0.0
    %802 = vmatprep.subr.mxu0 0.0
    %803 = vmatpush1.msra.mxu0 0.0
    %804 = vmatprep.subr.mxu0 0.0
    %805 = vmatpush1.msra.mxu0 0.0
    %806 = vmatprep.subr.mxu0 0.0
    %807 = vmatpush1.msra.mxu0 0.0
    %808 = vmatprep.subr.mxu0 0.0
    %809 = vmatpush1.msra.mxu0 0.0
    %810 = vmatprep.subr.mxu0 0.0
    %811 = vmatpush1.msra.mxu0 0.0
    %812 = vmatprep.subr.mxu0 0.0
    %813 = vmatpush1.msra.mxu0 0.0
    %814 = vmatprep.subr.mxu0 0.0
    %815 = vmatpush1.msra.mxu0 0.0
    %816 = vmatprep.subr.mxu0 0.0
    %817 = vmatpush1.msra.mxu0 0.0
    %818 = vmatprep.subr.mxu0 0.0
    %819 = vmatpush1.msra.mxu0 0.0
    %820 = vmatprep.subr.mxu0 0.0
    %821 = vmatpush1.msra.mxu0 0.0
    %822 = vmatprep.subr.mxu0 0.0
    %823 = vmatpush1.msra.mxu0 0.0
    %824 = vmatprep.subr.mxu0 0.0
    %825 = vmatpush1.msra.mxu0 %v794
    %826 = vmatprep.subr.mxu0 0.0
    %827 = vmatpush1.msra.mxu0 %v771
    %828 = vmatprep.subr.mxu0 0.0
    %829 = vmatpush2.msra.mxu0 0.0
    %830 = vmatprep.subr.mxu0 0.0
    %831 = vmatpush2.msra.mxu0 0.0
    %832 = vmatprep.subr.mxu0 0.0
    %833 = vmatpush2.msra.mxu0 0.0
    %834 = vmatprep.subr.mxu0 0.0
    %835 = vmatpush2.msra.mxu0 0.0
    %836 = vmatprep.subr.mxu0 0.0
    %837 = vmatpush2.msra.mxu0 0.0
    %838 = vmatprep.subr.mxu0 0.0
    %839 = vmatpush2.msra.mxu0 0.0
    %840 = vmatprep.subr.mxu0 0.0
    %841 = vmatpush2.msra.mxu0 0.0
    %842 = vmatprep.subr.mxu0 0.0
    %843 = vmatpush2.msra.mxu0 0.0
    %844 = vmatprep.subr.mxu0 0.0
    %845 = vmatpush2.msra.mxu0 0.0
    %846 = vmatprep.subr.mxu0 0.0
    %847 = vmatpush2.msra.mxu0 0.0
    %848 = vmatprep.subr.mxu0 0.0
    %849 = vmatpush2.msra.mxu0 0.0
    %850 = vmatprep.subr.mxu0 0.0
    %851 = vmatpush2.msra.mxu0 0.0
    %852 = vmatprep.subr.mxu0 0.0
    %853 = vmatpush2.msra.mxu0 0.0
    %854 = vmatprep.subr.mxu0 0.0
    %855 = vmatpush2.msra.mxu0 0.0
    %856 = vmatprep.subr.mxu0 0.0
    %857 = vmatpush2.msra.mxu0 0.0
    %858 = vmatprep.subr.mxu0 0.0
    %859 = vmatpush2.msra.mxu0 0.0
    %860 = vmatprep.mubr.f32.mxu0 0.0
    %861 = vmatmul.mubr.f32.gmra.mxu0 %v788
    %v862 = vpop.f32.mrf.mxu0
    %v863 = vadd.f32 %v784, %v862
    %v864 = vpop.f32.mrf.mxu0
    %865 = vmatprep.mubr.f32.mxu0 0.0
    %866 = vmatmul.mubr.f32.gmra.mxu0 %v791
    %v867 = vpop.f32.mrf.mxu0
    %v868 = vadd.f32 %v784, %v867
    %v869 = vpop.f32.mrf.mxu0
    %870 = vdwg.mxu0
    %v871 = vmax.f32 %v863, 0.0
    %v872 = vmax.f32 %v868, 0.0
    %v873 = vld [vmem:[#allocation26] sm:$0xff]
    %v874 = vld [vmem:[#allocation26 + $0x8] sm:$0xff]
    %vm875 = vcmask 130048
    %v877 = vsel %vm875, %v871, 0
    %v880 = vsel %vm875, %v872, 0
    %882 = vmatprep.subr.mxu0 0.0
    %883 = vmatpush1.msra.mxu0 0.0
    %884 = vmatprep.subr.mxu0 0.0
    %885 = vmatpush1.msra.mxu0 0.0
    %886 = vmatprep.subr.mxu0 0.0
    %887 = vmatpush1.msra.mxu0 0.0
    %888 = vmatprep.subr.mxu0 0.0
    %889 = vmatpush1.msra.mxu0 0.0
    %890 = vmatprep.subr.mxu0 0.0
    %891 = vmatpush1.msra.mxu0 0.0
    %892 = vmatprep.subr.mxu0 0.0
    %893 = vmatpush1.msra.mxu0 0.0
    %894 = vmatprep.subr.mxu0 0.0
    %895 = vmatpush1.msra.mxu0 0.0
    %896 = vmatprep.subr.mxu0 0.0
    %897 = vmatpush1.msra.mxu0 0.0
    %898 = vmatprep.subr.mxu0 0.0
    %899 = vmatpush1.msra.mxu0 0.0
    %900 = vmatprep.subr.mxu0 0.0
    %901 = vmatpush1.msra.mxu0 0.0
    %902 = vmatprep.subr.mxu0 0.0
    %903 = vmatpush1.msra.mxu0 0.0
    %904 = vmatprep.subr.mxu0 0.0
    %905 = vmatpush1.msra.mxu0 0.0
    %906 = vmatprep.subr.mxu0 0.0
    %907 = vmatpush1.msra.mxu0 0.0
    %908 = vmatprep.subr.mxu0 0.0
    %909 = vmatpush1.msra.mxu0 0.0
    %910 = vmatprep.subr.mxu0 0.0
    %911 = vmatpush1.msra.mxu0 %v874
    %912 = vmatprep.subr.mxu0 0.0
    %913 = vmatpush1.msra.mxu0 %v873
    %914 = vmatprep.subr.mxu0 0.0
    %915 = vmatpush2.msra.mxu0 0.0
    %916 = vmatprep.subr.mxu0 0.0
    %917 = vmatpush2.msra.mxu0 0.0
    %918 = vmatprep.subr.mxu0 0.0
    %919 = vmatpush2.msra.mxu0 0.0
    %920 = vmatprep.subr.mxu0 0.0
    %921 = vmatpush2.msra.mxu0 0.0
    %922 = vmatprep.subr.mxu0 0.0
    %923 = vmatpush2.msra.mxu0 0.0
    %924 = vmatprep.subr.mxu0 0.0
    %925 = vmatpush2.msra.mxu0 0.0
    %926 = vmatprep.subr.mxu0 0.0
    %927 = vmatpush2.msra.mxu0 0.0
    %928 = vmatprep.subr.mxu0 0.0
    %929 = vmatpush2.msra.mxu0 0.0
    %930 = vmatprep.subr.mxu0 0.0
    %931 = vmatpush2.msra.mxu0 0.0
    %932 = vmatprep.subr.mxu0 0.0
    %933 = vmatpush2.msra.mxu0 0.0
    %934 = vmatprep.subr.mxu0 0.0
    %935 = vmatpush2.msra.mxu0 0.0
    %936 = vmatprep.subr.mxu0 0.0
    %937 = vmatpush2.msra.mxu0 0.0
    %938 = vmatprep.subr.mxu0 0.0
    %939 = vmatpush2.msra.mxu0 0.0
    %940 = vmatprep.subr.mxu0 0.0
    %941 = vmatpush2.msra.mxu0 0.0
    %942 = vmatprep.subr.mxu0 0.0
    %943 = vmatpush2.msra.mxu0 0.0
    %944 = vmatprep.subr.mxu0 0.0
    %945 = vmatpush2.msra.mxu0 0.0
    %946 = vmatprep.mubr.f32.mxu0 0.0
    %947 = vmatmul.mubr.f32.gmra.mxu0 %v877
    %v948 = vpop.f32.mrf.mxu0
    %v949 = vadd.f32 0.0, %v948
    %v950 = vpop.f32.mrf.mxu0
    %951 = vmatprep.mubr.f32.mxu0 0.0
    %952 = vmatmul.mubr.f32.gmra.mxu0 %v880
    %v953 = vpop.f32.mrf.mxu0
    %v954 = vadd.f32 0.0, %v953
    %v955 = vpop.f32.mrf.mxu0
    %956 = vdwg.mxu0
    %v957 = vld [vmem:[#allocation27] sm:$0x1]
    %v959 = vlaneseq
    %v960 = vshrl.u32 %v959, 7
    %v961 = vsub.s32 0, %v960
    %v962 = vrot.slane %v957, %v961
    %v965 = vsel %vm617, %v954, 0
    %967 = vmatprep.subr.mxu0 0.0
    %968 = vmatpush1.msra.mxu0 0.0
    %969 = vmatprep.subr.mxu0 0.0
    %970 = vmatpush1.msra.mxu0 0.0
    %971 = vmatprep.subr.mxu0 0.0
    %972 = vmatpush1.msra.mxu0 0.0
    %973 = vmatprep.subr.mxu0 0.0
    %974 = vmatpush1.msra.mxu0 0.0
    %975 = vmatprep.subr.mxu0 0.0
    %976 = vmatpush1.msra.mxu0 0.0
    %977 = vmatprep.subr.mxu0 0.0
    %978 = vmatpush1.msra.mxu0 0.0
    %979 = vmatprep.subr.mxu0 0.0
    %980 = vmatpush1.msra.mxu0 0.0
    %981 = vmatprep.subr.mxu0 0.0
    %982 = vmatpush1.msra.mxu0 0.0
    %983 = vmatprep.subr.mxu0 0.0
    %984 = vmatpush1.msra.mxu0 0.0
    %985 = vmatprep.subr.mxu0 0.0
    %986 = vmatpush1.msra.mxu0 0.0
    %987 = vmatprep.subr.mxu0 0.0
    %988 = vmatpush1.msra.mxu0 0.0
    %989 = vmatprep.subr.mxu0 0.0
    %990 = vmatpush1.msra.mxu0 0.0
    %991 = vmatprep.subr.mxu0 0.0
    %992 = vmatpush1.msra.mxu0 0.0
    %993 = vmatprep.subr.mxu0 0.0
    %994 = vmatpush1.msra.mxu0 0.0
    %995 = vmatprep.subr.mxu0 0.0
    %996 = vmatpush1.msra.mxu0 %v965
    %997 = vmatprep.subr.mxu0 0.0
    %998 = vmatpush1.msra.mxu0 %v949
    %999 = vmatprep.subr.mxu0 0.0
    %1000 = vmatpush2.msra.mxu0 0.0
    %1001 = vmatprep.subr.mxu0 0.0
    %1002 = vmatpush2.msra.mxu0 0.0
    %1003 = vmatprep.subr.mxu0 0.0
    %1004 = vmatpush2.msra.mxu0 0.0
    %1005 = vmatprep.subr.mxu0 0.0
    %1006 = vmatpush2.msra.mxu0 0.0
    %1007 = vmatprep.subr.mxu0 0.0
    %1008 = vmatpush2.msra.mxu0 0.0
    %1009 = vmatprep.subr.mxu0 0.0
    %1010 = vmatpush2.msra.mxu0 0.0
    %1011 = vmatprep.subr.mxu0 0.0
    %1012 = vmatpush2.msra.mxu0 0.0
    %1013 = vmatprep.subr.mxu0 0.0
    %1014 = vmatpush2.msra.mxu0 0.0
    %1015 = vmatprep.subr.mxu0 0.0
    %1016 = vmatpush2.msra.mxu0 0.0
    %1017 = vmatprep.subr.mxu0 0.0
    %1018 = vmatpush2.msra.mxu0 0.0
    %1019 = vmatprep.subr.mxu0 0.0
    %1020 = vmatpush2.msra.mxu0 0.0
    %1021 = vmatprep.subr.mxu0 0.0
    %1022 = vmatpush2.msra.mxu0 0.0
    %1023 = vmatprep.subr.mxu0 0.0
    %1024 = vmatpush2.msra.mxu0 0.0
    %1025 = vmatprep.subr.mxu0 0.0
    %1026 = vmatpush2.msra.mxu0 0.0
    %1027 = vmatprep.subr.mxu0 0.0
    %1028 = vmatpush2.msra.mxu0 0.0
    %1029 = vmatprep.subr.mxu0 0.0
    %1030 = vmatpush2.msra.mxu0 0.0
    %1031 = vmatprep.mubr.f32.mxu0 0.0
    %1032 = vmatmul.mubr.f32.gmra.mxu0 %v788
    %v1033 = vpop.f32.mrf.mxu0
    %v1034 = vadd.f32 %v962, %v1033
    %v1035 = vpop.f32.mrf.mxu0
    %1036 = vmatprep.mubr.f32.mxu0 0.0
    %1037 = vmatmul.mubr.f32.gmra.mxu0 %v791
    %v1038 = vpop.f32.mrf.mxu0
    %v1039 = vadd.f32 %v962, %v1038
    %v1040 = vpop.f32.mrf.mxu0
    %1041 = vdwg.mxu0
    %v1042 = vmax.f32 %v1034, 0.0
    %v1043 = vmax.f32 %v1039, 0.0
    %v1044 = vld [vmem:[%s19] sm:$0xff]
    %v1045 = vld [vmem:[%s19 + $0x8] sm:$0xff]
    %v1046 = vld [vmem:[%s19 + $0x10] sm:$0xff]
    %v1047 = vld [vmem:[%s19 + $0x18] sm:$0xff]
    %vm1048 = vcmask 261120
    %v1050 = vsel %vm1048, %v1042, 0
    %v1053 = vsel %vm1048, %v1043, 0
    %1055 = vmatprep.subr.mxu0 0.0
    %1056 = vmatpush1.msra.mxu0 0.0
    %1057 = vmatprep.subr.mxu0 0.0
    %1058 = vmatpush1.msra.mxu0 0.0
    %1059 = vmatprep.subr.mxu0 0.0
    %1060 = vmatpush1.msra.mxu0 0.0
    %1061 = vmatprep.subr.mxu0 0.0
    %1062 = vmatpush1.msra.mxu0 0.0
    %1063 = vmatprep.subr.mxu0 0.0
    %1064 = vmatpush1.msra.mxu0 0.0
    %1065 = vmatprep.subr.mxu0 0.0
    %1066 = vmatpush1.msra.mxu0 0.0
    %1067 = vmatprep.subr.mxu0 0.0
    %1068 = vmatpush1.msra.mxu0 0.0
    %1069 = vmatprep.subr.mxu0 0.0
    %1070 = vmatpush1.msra.mxu0 0.0
    %1071 = vmatprep.subr.mxu0 0.0
    %1072 = vmatpush1.msra.mxu0 0.0
    %1073 = vmatprep.subr.mxu0 0.0
    %1074 = vmatpush1.msra.mxu0 0.0
    %1075 = vmatprep.subr.mxu0 0.0
    %1076 = vmatpush1.msra.mxu0 0.0
    %1077 = vmatprep.subr.mxu0 0.0
    %1078 = vmatpush1.msra.mxu0 0.0
    %1079 = vmatprep.subr.mxu0 0.0
    %1080 = vmatpush1.msra.mxu0 %v1047
    %1081 = vmatprep.subr.mxu0 0.0
    %1082 = vmatpush1.msra.mxu0 %v1046
    %1083 = vmatprep.subr.mxu0 0.0
    %1084 = vmatpush1.msra.mxu0 %v1045
    %1085 = vmatprep.subr.mxu0 0.0
    %1086 = vmatpush1.msra.mxu0 %v1044
    %1087 = vmatprep.subr.mxu0 0.0
    %1088 = vmatpush2.msra.mxu0 0.0
    %1089 = vmatprep.subr.mxu0 0.0
    %1090 = vmatpush2.msra.mxu0 0.0
    %1091 = vmatprep.subr.mxu0 0.0
    %1092 = vmatpush2.msra.mxu0 0.0
    %1093 = vmatprep.subr.mxu0 0.0
    %1094 = vmatpush2.msra.mxu0 0.0
    %1095 = vmatprep.subr.mxu0 0.0
    %1096 = vmatpush2.msra.mxu0 0.0
    %1097 = vmatprep.subr.mxu0 0.0
    %1098 = vmatpush2.msra.mxu0 0.0
    %1099 = vmatprep.subr.mxu0 0.0
    %1100 = vmatpush2.msra.mxu0 0.0
    %1101 = vmatprep.subr.mxu0 0.0
    %1102 = vmatpush2.msra.mxu0 0.0
    %1103 = vmatprep.subr.mxu0 0.0
    %1104 = vmatpush2.msra.mxu0 0.0
    %1105 = vmatprep.subr.mxu0 0.0
    %1106 = vmatpush2.msra.mxu0 0.0
    %1107 = vmatprep.subr.mxu0 0.0
    %1108 = vmatpush2.msra.mxu0 0.0
    %1109 = vmatprep.subr.mxu0 0.0
    %1110 = vmatpush2.msra.mxu0 0.0
    %1111 = vmatprep.subr.mxu0 0.0
    %1112 = vmatpush2.msra.mxu0 0.0
    %1113 = vmatprep.subr.mxu0 0.0
    %1114 = vmatpush2.msra.mxu0 0.0
    %1115 = vmatprep.subr.mxu0 0.0
    %1116 = vmatpush2.msra.mxu0 0.0
    %1117 = vmatprep.subr.mxu0 0.0
    %1118 = vmatpush2.msra.mxu0 0.0
    %1119 = vmatprep.mubr.f32.mxu0 0.0
    %1120 = vmatmul.mubr.f32.gmra.mxu0 %v1050
    %v1121 = vpop.f32.mrf.mxu0
    %v1122 = vadd.f32 0.0, %v1121
    %v1123 = vpop.f32.mrf.mxu0
    %1124 = vmatprep.mubr.f32.mxu0 0.0
    %1125 = vmatmul.mubr.f32.gmra.mxu0 %v1053
    %v1126 = vpop.f32.mrf.mxu0
    %v1127 = vadd.f32 0.0, %v1126
    %v1128 = vpop.f32.mrf.mxu0
    %1129 = vdwg.mxu0
    %v1130 = vld [vmem:[#allocation29] sm:$0x1]
    %v1132 = vlaneseq
    %v1133 = vshrl.u32 %v1132, 7
    %v1134 = vsub.s32 0, %v1133
    %v1135 = vrot.slane %v1130, %v1134
    %v1138 = vsel %vm617, %v1127, 0
    %1140 = vmatprep.subr.mxu0 0.0
    %1141 = vmatpush1.msra.mxu0 0.0
    %1142 = vmatprep.subr.mxu0 0.0
    %1143 = vmatpush1.msra.mxu0 0.0
    %1144 = vmatprep.subr.mxu0 0.0
    %1145 = vmatpush1.msra.mxu0 0.0
    %1146 = vmatprep.subr.mxu0 0.0
    %1147 = vmatpush1.msra.mxu0 0.0
    %1148 = vmatprep.subr.mxu0 0.0
    %1149 = vmatpush1.msra.mxu0 0.0
    %1150 = vmatprep.subr.mxu0 0.0
    %1151 = vmatpush1.msra.mxu0 0.0
    %1152 = vmatprep.subr.mxu0 0.0
    %1153 = vmatpush1.msra.mxu0 0.0
    %1154 = vmatprep.subr.mxu0 0.0
    %1155 = vmatpush1.msra.mxu0 0.0
    %1156 = vmatprep.subr.mxu0 0.0
    %1157 = vmatpush1.msra.mxu0 0.0
    %1158 = vmatprep.subr.mxu0 0.0
    %1159 = vmatpush1.msra.mxu0 0.0
    %1160 = vmatprep.subr.mxu0 0.0
    %1161 = vmatpush1.msra.mxu0 0.0
    %1162 = vmatprep.subr.mxu0 0.0
    %1163 = vmatpush1.msra.mxu0 0.0
    %1164 = vmatprep.subr.mxu0 0.0
    %1165 = vmatpush1.msra.mxu0 0.0
    %1166 = vmatprep.subr.mxu0 0.0
    %1167 = vmatpush1.msra.mxu0 0.0
    %1168 = vmatprep.subr.mxu0 0.0
    %1169 = vmatpush1.msra.mxu0 %v1138
    %1170 = vmatprep.subr.mxu0 0.0
    %1171 = vmatpush1.msra.mxu0 %v1122
    %1172 = vmatprep.subr.mxu0 0.0
    %1173 = vmatpush2.msra.mxu0 0.0
    %1174 = vmatprep.subr.mxu0 0.0
    %1175 = vmatpush2.msra.mxu0 0.0
    %1176 = vmatprep.subr.mxu0 0.0
    %1177 = vmatpush2.msra.mxu0 0.0
    %1178 = vmatprep.subr.mxu0 0.0
    %1179 = vmatpush2.msra.mxu0 0.0
    %1180 = vmatprep.subr.mxu0 0.0
    %1181 = vmatpush2.msra.mxu0 0.0
    %1182 = vmatprep.subr.mxu0 0.0
    %1183 = vmatpush2.msra.mxu0 0.0
    %1184 = vmatprep.subr.mxu0 0.0
    %1185 = vmatpush2.msra.mxu0 0.0
    %1186 = vmatprep.subr.mxu0 0.0
    %1187 = vmatpush2.msra.mxu0 0.0
    %1188 = vmatprep.subr.mxu0 0.0
    %1189 = vmatpush2.msra.mxu0 0.0
    %1190 = vmatprep.subr.mxu0 0.0
    %1191 = vmatpush2.msra.mxu0 0.0
    %1192 = vmatprep.subr.mxu0 0.0
    %1193 = vmatpush2.msra.mxu0 0.0
    %1194 = vmatprep.subr.mxu0 0.0
    %1195 = vmatpush2.msra.mxu0 0.0
    %1196 = vmatprep.subr.mxu0 0.0
    %1197 = vmatpush2.msra.mxu0 0.0
    %1198 = vmatprep.subr.mxu0 0.0
    %1199 = vmatpush2.msra.mxu0 0.0
    %1200 = vmatprep.subr.mxu0 0.0
    %1201 = vmatpush2.msra.mxu0 0.0
    %1202 = vmatprep.subr.mxu0 0.0
    %1203 = vmatpush2.msra.mxu0 0.0
    %1204 = vmatprep.mubr.f32.mxu0 0.0
    %1205 = vmatmul.mubr.f32.gmra.mxu0 %v788
    %v1206 = vpop.f32.mrf.mxu0
    %v1207 = vadd.f32 %v1135, %v1206
    %v1208 = vpop.f32.mrf.mxu0
    %1209 = vmatprep.mubr.f32.mxu0 0.0
    %1210 = vmatmul.mubr.f32.gmra.mxu0 %v791
    %v1211 = vpop.f32.mrf.mxu0
    %v1212 = vadd.f32 %v1135, %v1211
    %v1213 = vpop.f32.mrf.mxu0
    %1214 = vdwg.mxu0
    %v1215 = vmax.f32 %v1207, 0.0
    %v1216 = vmax.f32 %v1212, 0.0
    %v1217 = vld [vmem:[#allocation11] sm:$0x3]
    %v1219 = vsel %vm786, %v1217, 0
    %v1222 = vsel %vm617, %v1216, 0
    %1224 = vmatprep.subr.mxu0 0.0
    %1225 = vmatpush1.msra.mxu0 0.0
    %1226 = vmatprep.subr.mxu0 0.0
    %1227 = vmatpush1.msra.mxu0 0.0
    %1228 = vmatprep.subr.mxu0 0.0
    %1229 = vmatpush1.msra.mxu0 0.0
    %1230 = vmatprep.subr.mxu0 0.0
    %1231 = vmatpush1.msra.mxu0 0.0
    %1232 = vmatprep.subr.mxu0 0.0
    %1233 = vmatpush1.msra.mxu0 0.0
    %1234 = vmatprep.subr.mxu0 0.0
    %1235 = vmatpush1.msra.mxu0 0.0
    %1236 = vmatprep.subr.mxu0 0.0
    %1237 = vmatpush1.msra.mxu0 0.0
    %1238 = vmatprep.subr.mxu0 0.0
    %1239 = vmatpush1.msra.mxu0 0.0
    %1240 = vmatprep.subr.mxu0 0.0
    %1241 = vmatpush1.msra.mxu0 0.0
    %1242 = vmatprep.subr.mxu0 0.0
    %1243 = vmatpush1.msra.mxu0 0.0
    %1244 = vmatprep.subr.mxu0 0.0
    %1245 = vmatpush1.msra.mxu0 0.0
    %1246 = vmatprep.subr.mxu0 0.0
    %1247 = vmatpush1.msra.mxu0 0.0
    %1248 = vmatprep.subr.mxu0 0.0
    %1249 = vmatpush1.msra.mxu0 0.0
    %1250 = vmatprep.subr.mxu0 0.0
    %1251 = vmatpush1.msra.mxu0 0.0
    %1252 = vmatprep.subr.mxu0 0.0
    %1253 = vmatpush1.msra.mxu0 %v1222
    %1254 = vmatprep.subr.mxu0 0.0
    %1255 = vmatpush1.msra.mxu0 %v1215
    %1256 = vmatprep.subr.mxu0 0.0
    %1257 = vmatpush2.msra.mxu0 0.0
    %1258 = vmatprep.subr.mxu0 0.0
    %1259 = vmatpush2.msra.mxu0 0.0
    %1260 = vmatprep.subr.mxu0 0.0
    %1261 = vmatpush2.msra.mxu0 0.0
    %1262 = vmatprep.subr.mxu0 0.0
    %1263 = vmatpush2.msra.mxu0 0.0
    %1264 = vmatprep.subr.mxu0 0.0
    %1265 = vmatpush2.msra.mxu0 0.0
    %1266 = vmatprep.subr.mxu0 0.0
    %1267 = vmatpush2.msra.mxu0 0.0
    %1268 = vmatprep.subr.mxu0 0.0
    %1269 = vmatpush2.msra.mxu0 0.0
    %1270 = vmatprep.subr.mxu0 0.0
    %1271 = vmatpush2.msra.mxu0 0.0
    %1272 = vmatprep.subr.mxu0 0.0
    %1273 = vmatpush2.msra.mxu0 0.0
    %1274 = vmatprep.subr.mxu0 0.0
    %1275 = vmatpush2.msra.mxu0 0.0
    %1276 = vmatprep.subr.mxu0 0.0
    %1277 = vmatpush2.msra.mxu0 0.0
    %1278 = vmatprep.subr.mxu0 0.0
    %1279 = vmatpush2.msra.mxu0 0.0
    %1280 = vmatprep.subr.mxu0 0.0
    %1281 = vmatpush2.msra.mxu0 0.0
    %1282 = vmatprep.subr.mxu0 0.0
    %1283 = vmatpush2.msra.mxu0 0.0
    %1284 = vmatprep.subr.mxu0 0.0
    %1285 = vmatpush2.msra.mxu0 0.0
    %1286 = vmatprep.subr.mxu0 0.0
    %1287 = vmatpush2.msra.mxu0 0.0
    %1288 = vmatprep.mubr.f32.mxu0 0.0
    %1289 = vmatmul.mubr.f32.gmra.mxu0 %v1219
    %v1290 = vpop.f32.mrf.mxu0
    %v1291 = vadd.f32 0.0, %v1290
    %v1292 = vpop.f32.mrf.mxu0
    %1293 = vdwg.mxu0
    %v1294 = vld [vmem:[#allocation30] sm:$0xff]
    %v1295 = vld [vmem:[#allocation30 + $0x8] sm:$0xff]
    %v1296 = vld [vmem:[#allocation30 + $0x10] sm:$0xff]
    %v1297 = vld [vmem:[#allocation30 + $0x18] sm:$0xff]
    %v1298 = vld [vmem:[#allocation30 + $0x20] sm:$0xff]
    %v1299 = vld [vmem:[#allocation30 + $0x28] sm:$0xff]
    %v1300 = vld [vmem:[#allocation30 + $0x30] sm:$0xff]
    %v1301 = vld [vmem:[#allocation30 + $0x38] sm:$0xff]
    %v1302 = vld [vmem:[#allocation12] sm:$0x3]
    %v1303 = vld [vmem:[#allocation32] sm:$0xff]
    %v1305 = vsel %vm697, %v1302, 0
    %1307 = vmatprep.subr.mxu0 0.0
    %1308 = vmatpush1.msra.mxu0 0.0
    %1309 = vmatprep.subr.mxu0 0.0
    %1310 = vmatpush1.msra.mxu0 0.0
    %1311 = vmatprep.subr.mxu0 0.0
    %1312 = vmatpush1.msra.mxu0 0.0
    %1313 = vmatprep.subr.mxu0 0.0
    %1314 = vmatpush1.msra.mxu0 0.0
    %1315 = vmatprep.subr.mxu0 0.0
    %1316 = vmatpush1.msra.mxu0 0.0
    %1317 = vmatprep.subr.mxu0 0.0
    %1318 = vmatpush1.msra.mxu0 0.0
    %1319 = vmatprep.subr.mxu0 0.0
    %1320 = vmatpush1.msra.mxu0 0.0
    %1321 = vmatprep.subr.mxu0 0.0
    %1322 = vmatpush1.msra.mxu0 0.0
    %1323 = vmatprep.subr.mxu0 0.0
    %1324 = vmatpush1.msra.mxu0 0.0
    %1325 = vmatprep.subr.mxu0 0.0
    %1326 = vmatpush1.msra.mxu0 0.0
    %1327 = vmatprep.subr.mxu0 0.0
    %1328 = vmatpush1.msra.mxu0 0.0
    %1329 = vmatprep.subr.mxu0 0.0
    %1330 = vmatpush1.msra.mxu0 0.0
    %1331 = vmatprep.subr.mxu0 0.0
    %1332 = vmatpush1.msra.mxu0 0.0
    %1333 = vmatprep.subr.mxu0 0.0
    %1334 = vmatpush1.msra.mxu0 0.0
    %1335 = vmatprep.subr.mxu0 0.0
    %1336 = vmatpush1.msra.mxu0 0.0
    %1337 = vmatprep.subr.mxu0 0.0
    %1338 = vmatpush1.msra.mxu0 %v1303
    %1339 = vmatprep.subr.mxu0 0.0
    %1340 = vmatpush2.msra.mxu0 0.0
    %1341 = vmatprep.subr.mxu0 0.0
    %1342 = vmatpush2.msra.mxu0 0.0
    %1343 = vmatprep.subr.mxu0 0.0
    %1344 = vmatpush2.msra.mxu0 0.0
    %1345 = vmatprep.subr.mxu0 0.0
    %1346 = vmatpush2.msra.mxu0 0.0
    %1347 = vmatprep.subr.mxu0 0.0
    %1348 = vmatpush2.msra.mxu0 0.0
    %1349 = vmatprep.subr.mxu0 0.0
    %1350 = vmatpush2.msra.mxu0 0.0
    %1351 = vmatprep.subr.mxu0 0.0
    %1352 = vmatpush2.msra.mxu0 0.0
    %1353 = vmatprep.subr.mxu0 0.0
    %1354 = vmatpush2.msra.mxu0 0.0
    %1355 = vmatprep.subr.mxu0 0.0
    %1356 = vmatpush2.msra.mxu0 0.0
    %1357 = vmatprep.subr.mxu0 0.0
    %1358 = vmatpush2.msra.mxu0 0.0
    %1359 = vmatprep.subr.mxu0 0.0
    %1360 = vmatpush2.msra.mxu0 0.0
    %1361 = vmatprep.subr.mxu0 0.0
    %1362 = vmatpush2.msra.mxu0 0.0
    %1363 = vmatprep.subr.mxu0 0.0
    %1364 = vmatpush2.msra.mxu0 0.0
    %1365 = vmatprep.subr.mxu0 0.0
    %1366 = vmatpush2.msra.mxu0 0.0
    %1367 = vmatprep.subr.mxu0 0.0
    %1368 = vmatpush2.msra.mxu0 0.0
    %1369 = vmatprep.subr.mxu0 0.0
    %1370 = vmatpush2.msra.mxu0 0.0
    %1371 = vmatprep.mubr.f32.mxu0 0.0
    %1372 = vmatmul.mubr.f32.gmra.mxu0 %v1305
    %v1373 = vpop.f32.mrf.mxu0
    %v1374 = vadd.f32 0.0, %v1373
    %v1375 = vpop.f32.mrf.mxu0
    %1376 = vdwg.mxu0
    %vm1377 = vcmask 523264
    %v1379 = vsel %vm1377, %v1291, 0
    %1381 = vmatprep.subr.mxu0 0.0
    %1382 = vmatpush1.msra.mxu0 0.0
    %1383 = vmatprep.subr.mxu0 0.0
    %1384 = vmatpush1.msra.mxu0 0.0
    %1385 = vmatprep.subr.mxu0 0.0
    %1386 = vmatpush1.msra.mxu0 0.0
    %1387 = vmatprep.subr.mxu0 0.0
    %1388 = vmatpush1.msra.mxu0 0.0
    %1389 = vmatprep.subr.mxu0 0.0
    %1390 = vmatpush1.msra.mxu0 0.0
    %1391 = vmatprep.subr.mxu0 0.0
    %1392 = vmatpush1.msra.mxu0 0.0
    %1393 = vmatprep.subr.mxu0 0.0
    %1394 = vmatpush1.msra.mxu0 0.0
    %1395 = vmatprep.subr.mxu0 0.0
    %1396 = vmatpush1.msra.mxu0 0.0
    %1397 = vmatprep.subr.mxu0 0.0
    %1398 = vmatpush1.msra.mxu0 %v1301
    %1399 = vmatprep.subr.mxu0 0.0
    %1400 = vmatpush1.msra.mxu0 %v1300
    %1401 = vmatprep.subr.mxu0 0.0
    %1402 = vmatpush1.msra.mxu0 %v1299
    %1403 = vmatprep.subr.mxu0 0.0
    %1404 = vmatpush1.msra.mxu0 %v1298
    %1405 = vmatprep.subr.mxu0 0.0
    %1406 = vmatpush1.msra.mxu0 %v1297
    %1407 = vmatprep.subr.mxu0 0.0
    %1408 = vmatpush1.msra.mxu0 %v1296
    %1409 = vmatprep.subr.mxu0 0.0
    %1410 = vmatpush1.msra.mxu0 %v1295
    %1411 = vmatprep.subr.mxu0 0.0
    %1412 = vmatpush1.msra.mxu0 %v1294
    %1413 = vmatprep.subr.mxu0 0.0
    %1414 = vmatpush2.msra.mxu0 0.0
    %1415 = vmatprep.subr.mxu0 0.0
    %1416 = vmatpush2.msra.mxu0 0.0
    %1417 = vmatprep.subr.mxu0 0.0
    %1418 = vmatpush2.msra.mxu0 0.0
    %1419 = vmatprep.subr.mxu0 0.0
    %1420 = vmatpush2.msra.mxu0 0.0
    %1421 = vmatprep.subr.mxu0 0.0
    %1422 = vmatpush2.msra.mxu0 0.0
    %1423 = vmatprep.subr.mxu0 0.0
    %1424 = vmatpush2.msra.mxu0 0.0
    %1425 = vmatprep.subr.mxu0 0.0
    %1426 = vmatpush2.msra.mxu0 0.0
    %1427 = vmatprep.subr.mxu0 0.0
    %1428 = vmatpush2.msra.mxu0 0.0
    %1429 = vmatprep.subr.mxu0 0.0
    %1430 = vmatpush2.msra.mxu0 0.0
    %1431 = vmatprep.subr.mxu0 0.0
    %1432 = vmatpush2.msra.mxu0 0.0
    %1433 = vmatprep.subr.mxu0 0.0
    %1434 = vmatpush2.msra.mxu0 0.0
    %1435 = vmatprep.subr.mxu0 0.0
    %1436 = vmatpush2.msra.mxu0 0.0
    %1437 = vmatprep.subr.mxu0 0.0
    %1438 = vmatpush2.msra.mxu0 0.0
    %1439 = vmatprep.subr.mxu0 0.0
    %1440 = vmatpush2.msra.mxu0 0.0
    %1441 = vmatprep.subr.mxu0 0.0
    %1442 = vmatpush2.msra.mxu0 0.0
    %1443 = vmatprep.subr.mxu0 0.0
    %1444 = vmatpush2.msra.mxu0 0.0
    %1445 = vmatprep.mubr.f32.mxu0 0.0
    %1446 = vmatmul.mubr.f32.gmra.mxu0 %v1379
    %v1447 = vpop.f32.mrf.mxu0
    %v1448 = vadd.f32 %v1374, %v1447
    %v1449 = vpop.f32.mrf.mxu0
    %1450 = vdwg.mxu0
    %v1451 = vld [vmem:[#allocation33] sm:$0x1]
    %v1453 = vlaneseq
    %v1454 = vshrl.u32 %v1453, 7
    %v1455 = vsub.s32 0, %v1454
    %v1456 = vrot.slane %v1451, %v1455
    %v1458 = vadd.f32 %v1448, %v1456
    %v1459 = vmax.f32 %v1458, 0.0
    %v1460 = vld [vmem:[%s24] sm:$0xff]
    %v1461 = vld [vmem:[%s24 + $0x8] sm:$0xff]
    %v1462 = vld [vmem:[%s24 + $0x10] sm:$0xff]
    %v1463 = vld [vmem:[%s24 + $0x18] sm:$0xff]
    %v1464 = vld [vmem:[%s24 + $0x20] sm:$0xff]
    %v1465 = vld [vmem:[%s24 + $0x28] sm:$0xff]
    %v1466 = vld [vmem:[%s24 + $0x30] sm:$0xff]
    %v1467 = vld [vmem:[%s24 + $0x38] sm:$0xff]
    %v1468 = vld [vmem:[%s24 + $0x40] sm:$0xff]
    %v1469 = vld [vmem:[%s24 + $0x48] sm:$0xff]
    %v1470 = vld [vmem:[%s24 + $0x50] sm:$0xff]
    %v1471 = vld [vmem:[%s24 + $0x58] sm:$0xff]
    %v1472 = vld [vmem:[%s24 + $0x60] sm:$0xff]
    %v1473 = vld [vmem:[%s24 + $0x68] sm:$0xff]
    %v1474 = vld [vmem:[%s24 + $0x70] sm:$0xff]
    %v1475 = vld [vmem:[%s24 + $0x78] sm:$0xff]
    %v1476 = vld [vmem:[#allocation35] sm:$0x1]
    %v1478 = vlaneseq
    %v1479 = vshrl.u32 %v1478, 7
    %v1480 = vsub.s32 0, %v1479
    %v1481 = vrot.slane %v1476, %v1480
    %1483 = vmatprep.subr.mxu0 0.0
    %1484 = vmatpush1.msra.mxu0 %v1475
    %1485 = vmatprep.subr.mxu0 0.0
    %1486 = vmatpush1.msra.mxu0 %v1474
    %1487 = vmatprep.subr.mxu0 0.0
    %1488 = vmatpush1.msra.mxu0 %v1473
    %1489 = vmatprep.subr.mxu0 0.0
    %1490 = vmatpush1.msra.mxu0 %v1472
    %1491 = vmatprep.subr.mxu0 0.0
    %1492 = vmatpush1.msra.mxu0 %v1471
    %1493 = vmatprep.subr.mxu0 0.0
    %1494 = vmatpush1.msra.mxu0 %v1470
    %1495 = vmatprep.subr.mxu0 0.0
    %1496 = vmatpush1.msra.mxu0 %v1469
    %1497 = vmatprep.subr.mxu0 0.0
    %1498 = vmatpush1.msra.mxu0 %v1468
    %1499 = vmatprep.subr.mxu0 0.0
    %1500 = vmatpush1.msra.mxu0 %v1467
    %1501 = vmatprep.subr.mxu0 0.0
    %1502 = vmatpush1.msra.mxu0 %v1466
    %1503 = vmatprep.subr.mxu0 0.0
    %1504 = vmatpush1.msra.mxu0 %v1465
    %1505 = vmatprep.subr.mxu0 0.0
    %1506 = vmatpush1.msra.mxu0 %v1464
    %1507 = vmatprep.subr.mxu0 0.0
    %1508 = vmatpush1.msra.mxu0 %v1463
    %1509 = vmatprep.subr.mxu0 0.0
    %1510 = vmatpush1.msra.mxu0 %v1462
    %1511 = vmatprep.subr.mxu0 0.0
    %1512 = vmatpush1.msra.mxu0 %v1461
    %1513 = vmatprep.subr.mxu0 0.0
    %1514 = vmatpush1.msra.mxu0 %v1460
    %1515 = vmatprep.subr.mxu0 0.0
    %1516 = vmatpush2.msra.mxu0 0.0
    %1517 = vmatprep.subr.mxu0 0.0
    %1518 = vmatpush2.msra.mxu0 0.0
    %1519 = vmatprep.subr.mxu0 0.0
    %1520 = vmatpush2.msra.mxu0 0.0
    %1521 = vmatprep.subr.mxu0 0.0
    %1522 = vmatpush2.msra.mxu0 0.0
    %1523 = vmatprep.subr.mxu0 0.0
    %1524 = vmatpush2.msra.mxu0 0.0
    %1525 = vmatprep.subr.mxu0 0.0
    %1526 = vmatpush2.msra.mxu0 0.0
    %1527 = vmatprep.subr.mxu0 0.0
    %1528 = vmatpush2.msra.mxu0 0.0
    %1529 = vmatprep.subr.mxu0 0.0
    %1530 = vmatpush2.msra.mxu0 0.0
    %1531 = vmatprep.subr.mxu0 0.0
    %1532 = vmatpush2.msra.mxu0 0.0
    %1533 = vmatprep.subr.mxu0 0.0
    %1534 = vmatpush2.msra.mxu0 0.0
    %1535 = vmatprep.subr.mxu0 0.0
    %1536 = vmatpush2.msra.mxu0 0.0
    %1537 = vmatprep.subr.mxu0 0.0
    %1538 = vmatpush2.msra.mxu0 0.0
    %1539 = vmatprep.subr.mxu0 0.0
    %1540 = vmatpush2.msra.mxu0 0.0
    %1541 = vmatprep.subr.mxu0 0.0
    %1542 = vmatpush2.msra.mxu0 0.0
    %1543 = vmatprep.subr.mxu0 0.0
    %1544 = vmatpush2.msra.mxu0 0.0
    %1545 = vmatprep.subr.mxu0 0.0
    %1546 = vmatpush2.msra.mxu0 0.0
    %1547 = vmatprep.mubr.f32.mxu0 0.0
    %1548 = vmatmul.mubr.f32.gmra.mxu0 %v1459
    %v1549 = vpop.f32.mrf.mxu0
    %v1550 = vadd.f32 %v1481, %v1549
    %v1551 = vpop.f32.mrf.mxu0
    %1552 = vdwg.mxu0
    %v1553 = vmax.f32 %v1550, 0.0
    %v1554 = vld [vmem:[%s26] sm:$0xff]
    %v1555 = vld [vmem:[%s26 + $0x8] sm:$0xff]
    %v1556 = vld [vmem:[%s26 + $0x10] sm:$0xff]
    %v1557 = vld [vmem:[%s26 + $0x18] sm:$0xff]
    %v1558 = vld [vmem:[%s26 + $0x20] sm:$0xff]
    %v1559 = vld [vmem:[%s26 + $0x28] sm:$0xff]
    %v1560 = vld [vmem:[%s26 + $0x30] sm:$0xff]
    %v1561 = vld [vmem:[%s26 + $0x38] sm:$0xff]
    %v1562 = vld [vmem:[%s26 + $0x40] sm:$0xff]
    %v1563 = vld [vmem:[%s26 + $0x48] sm:$0xff]
    %v1564 = vld [vmem:[%s26 + $0x50] sm:$0xff]
    %v1565 = vld [vmem:[%s26 + $0x58] sm:$0xff]
    %v1566 = vld [vmem:[%s26 + $0x60] sm:$0xff]
    %v1567 = vld [vmem:[%s26 + $0x68] sm:$0xff]
    %v1568 = vld [vmem:[%s26 + $0x70] sm:$0xff]
    %v1569 = vld [vmem:[%s26 + $0x78] sm:$0xff]
    %v1570 = vld [vmem:[%s27] sm:$0x1]
    %v1572 = vlaneseq
    %v1573 = vshrl.u32 %v1572, 7
    %v1574 = vsub.s32 0, %v1573
    %v1575 = vrot.slane %v1570, %v1574
    %1577 = vmatprep.subr.mxu0 0.0
    %1578 = vmatpush1.msra.mxu0 %v1569
    %1579 = vmatprep.subr.mxu0 0.0
    %1580 = vmatpush1.msra.mxu0 %v1568
    %1581 = vmatprep.subr.mxu0 0.0
    %1582 = vmatpush1.msra.mxu0 %v1567
    %1583 = vmatprep.subr.mxu0 0.0
    %1584 = vmatpush1.msra.mxu0 %v1566
    %1585 = vmatprep.subr.mxu0 0.0
    %1586 = vmatpush1.msra.mxu0 %v1565
    %1587 = vmatprep.subr.mxu0 0.0
    %1588 = vmatpush1.msra.mxu0 %v1564
    %1589 = vmatprep.subr.mxu0 0.0
    %1590 = vmatpush1.msra.mxu0 %v1563
    %1591 = vmatprep.subr.mxu0 0.0
    %1592 = vmatpush1.msra.mxu0 %v1562
    %1593 = vmatprep.subr.mxu0 0.0
    %1594 = vmatpush1.msra.mxu0 %v1561
    %1595 = vmatprep.subr.mxu0 0.0
    %1596 = vmatpush1.msra.mxu0 %v1560
    %1597 = vmatprep.subr.mxu0 0.0
    %1598 = vmatpush1.msra.mxu0 %v1559
    %1599 = vmatprep.subr.mxu0 0.0
    %1600 = vmatpush1.msra.mxu0 %v1558
    %1601 = vmatprep.subr.mxu0 0.0
    %1602 = vmatpush1.msra.mxu0 %v1557
    %1603 = vmatprep.subr.mxu0 0.0
    %1604 = vmatpush1.msra.mxu0 %v1556
    %1605 = vmatprep.subr.mxu0 0.0
    %1606 = vmatpush1.msra.mxu0 %v1555
    %1607 = vmatprep.subr.mxu0 0.0
    %1608 = vmatpush1.msra.mxu0 %v1554
    %1609 = vmatprep.subr.mxu0 0.0
    %1610 = vmatpush2.msra.mxu0 0.0
    %1611 = vmatprep.subr.mxu0 0.0
    %1612 = vmatpush2.msra.mxu0 0.0
    %1613 = vmatprep.subr.mxu0 0.0
    %1614 = vmatpush2.msra.mxu0 0.0
    %1615 = vmatprep.subr.mxu0 0.0
    %1616 = vmatpush2.msra.mxu0 0.0
    %1617 = vmatprep.subr.mxu0 0.0
    %1618 = vmatpush2.msra.mxu0 0.0
    %1619 = vmatprep.subr.mxu0 0.0
    %1620 = vmatpush2.msra.mxu0 0.0
    %1621 = vmatprep.subr.mxu0 0.0
    %1622 = vmatpush2.msra.mxu0 0.0
    %1623 = vmatprep.subr.mxu0 0.0
    %1624 = vmatpush2.msra.mxu0 0.0
    %1625 = vmatprep.subr.mxu0 0.0
    %1626 = vmatpush2.msra.mxu0 0.0
    %1627 = vmatprep.subr.mxu0 0.0
    %1628 = vmatpush2.msra.mxu0 0.0
    %1629 = vmatprep.subr.mxu0 0.0
    %1630 = vmatpush2.msra.mxu0 0.0
    %1631 = vmatprep.subr.mxu0 0.0
    %1632 = vmatpush2.msra.mxu0 0.0
    %1633 = vmatprep.subr.mxu0 0.0
    %1634 = vmatpush2.msra.mxu0 0.0
    %1635 = vmatprep.subr.mxu0 0.0
    %1636 = vmatpush2.msra.mxu0 0.0
    %1637 = vmatprep.subr.mxu0 0.0
    %1638 = vmatpush2.msra.mxu0 0.0
    %1639 = vmatprep.subr.mxu0 0.0
    %1640 = vmatpush2.msra.mxu0 0.0
    %1641 = vmatprep.mubr.f32.mxu0 0.0
    %1642 = vmatmul.mubr.f32.gmra.mxu0 %v1553
    %v1643 = vpop.f32.mrf.mxu0
    %v1644 = vadd.f32 %v1575, %v1643
    %v1645 = vpop.f32.mrf.mxu0
    %1646 = vdwg.mxu0
    %vm1647 = vcmask 9216
    %1648 = vst.msk [vmem:[#allocation36] sm:$0x3] %vm1647, %v1644
    // Predicated region
    $region198: #{tpu_custom_call.1} parent=1 // pred_check
      _
    $region199: #{tpu_custom_call.1} parent=1 // pred_check_branch
      %1650 = sbr.rel (0) target = $region201
    $region200: #{tpu_custom_call.1} parent=1 // pred_region
      %s1652 = ssub.s32 32, 32
      %1653 = vsyncadd [#allocation5], %s1652
      %s1655 = sshll.u32 [#allocation36], 4
      %s1656 = int_to_ptr.vmem [resolvable:$true] %s1655
      %1658 = dma.vmem_to_hbm [thread:$0]  %s1656, 32, %s28, [#allocation5]
    $region201: #{tpu_custom_call.1} parent=1 // pred_fallthru
      _
    // Predicated region
    $region202: #{tpu_custom_call.1} parent=1 // pred_check
      _
    $region203: #{tpu_custom_call.1} parent=1 // pred_check_branch
      %1660 = sbr.rel (0) target = $region205
    $region204: #{tpu_custom_call.1} parent=1 // pred_region
      %1661 = dma.done [#allocation5], 32
    $region205: #{tpu_custom_call.1} parent=1 // pred_fallthru
      _
    %1662 = vsyncpa [#allocation4], 1
    %1663 = vsyncpa [#allocation7], 1
    %1664 = vsyncpa [#allocation10], 1
    %1665 = vsyncpa [#allocation13], 1
    %1666 = vsyncpa [#allocation16], 1
    %1667 = vsyncpa [#allocation19], 1
    %1668 = vsyncpa [#allocation22], 1
    %1669 = vsyncpa [#allocation25], 1
    %1670 = vsyncpa [#allocation28], 1
    %1671 = vsyncpa [#allocation31], 1
    %1672 = vsyncpa [#allocation34], 1
    %1673 = vsyncpa [#allocation5], 1

</llo_original>
